<compile_context>
chip_gen: v7x
topology: tpu7x:2x2x1
jax: 0.10.0
libtpu: 0.0.40
codegen_flags: <defaults>
</compile_context>

<pallas_src>
import jax
import jax.numpy as jnp
from jax import lax
from jax.experimental import pallas as pl
from jax.experimental.pallas import tpu as pltpu


def _round_up(x, m):
    return (x + m - 1) // m * m


def _make_kernel(Co, W, S, C3p):
    """Fused per-image kernel. Spatial is flattened: S = H*W."""
    pad_rows = C3p - 3 * Co

    def kernel(x1s_ref, x2_ref, x3_ref, wd_ref, bd_ref, wu_ref, bu_ref,
               w3_ref, b3_ref, scat_ref, mask_ref, out_ref, patch_ref):
        f32 = jnp.float32
        bf16 = jnp.bfloat16

        # ---- conv_down: one bf16 MXU matmul, spatial on the lane/N axis ----
        down = jnp.dot(wd_ref[...], x1s_ref[0],
                       preferred_element_type=f32) + bd_ref[...]        # (Co, S)

        # ---- conv_up (ConvTranspose k2s2): matmul at quarter resolution,
        #      depth-to-space via precomputed 0/1 scatter matrices (bf16) -----
        up4 = jnp.dot(wu_ref[...], x3_ref[0],
                      preferred_element_type=f32)                       # (4Co, Sq)
        up = jnp.dot(up4[0:Co, :].astype(bf16), scat_ref[0],
                     preferred_element_type=f32)
        for k in range(1, 4):
            up = up + jnp.dot(up4[k * Co:(k + 1) * Co, :].astype(bf16),
                              scat_ref[k], preferred_element_type=f32)
        up = up + bu_ref[...]                                           # (Co, S)

        # ---- merged tensor lives in registers (no scratch, no zeroing) -----
        pieces = [down, x2_ref[0].astype(f32), up]
        if pad_rows:
            pieces.append(jnp.zeros((pad_rows, S), f32))
        merged = jnp.concatenate(pieces, axis=0)                        # (C3p, S)

        # ---- dwconv_se (3x3, pad=1): 9 rolled/masked taps stacked along K,
        #      stored lane-dense + 32-row aligned into the bf16 patch scratch,
        #      then ONE K = 9*C3p bf16 MXU matmul ----------------------------
        for dy in range(3):
            for dx in range(3):
                t = dy * 3 + dx
                off = (dy - 1) * W + (dx - 1)
                tap = merged if off == 0 else pltpu.roll(merged, (-off) % S,
                                                         axis=1)
                if t != 4:  # center tap mask is all-ones -> skip the multiply
                    tap = tap * mask_ref[t:t + 1, :]
                patch_ref[t * C3p:(t + 1) * C3p, :] = tap.astype(bf16)

        out = jnp.dot(w3_ref[...], patch_ref[...],
                      preferred_element_type=f32) + b3_ref[...]         # (Co, S)
        out_ref[0] = out

    return kernel


def merge_c2f_t_c_forward(x1, x2, x3, params):
    """x1:(N,Cd,2H,2W)  x2:(N,Co,H,W)  x3:(N,Cu,H/2,W/2) -> (N,Co,H,W), NCHW."""
    wd, bd, wu, bu, w3, b3 = (params[k] for k in
                              ("wd", "bd", "wu", "bu", "w3", "b3"))
    N, Co, H, W = x2.shape
    Cd = x1.shape[1]
    Cu = x3.shape[1]
    assert H % 2 == 0 and W % 2 == 0, "even spatial dims required (stride-2)"
    assert x1.shape == (N, Cd, 2 * H, 2 * W)
    Hh, Wh = H // 2, W // 2
    assert x3.shape == (N, Cu, Hh, Wh)
    S, Sq = H * W, Hh * Wh
    C3 = 3 * Co
    C3p = _round_up(C3, 16)        # bf16 sublane tile = 16 -> aligned tap stores
    Cd4 = 4 * Cd
    bf16 = jnp.bfloat16
    f32 = jnp.float32

    # ---- layout glue: only x1 needs a real HBM pass (space-to-depth + bf16);
    #      x2 / x3 / output reshapes are free row-major reshapes --------------
    x1s = (x1.reshape(N, Cd, H, 2, W, 2)
             .transpose(0, 3, 5, 1, 2, 4)          # (n, kh, kw, ci, y, x)
             .reshape(N, Cd4, S)
             .astype(bf16))
    x2f = x2.reshape(N, Co, S).astype(bf16)
    x3f = x3.reshape(N, Cu, Sq).astype(bf16)

    wd_mat = wd.transpose(0, 2, 3, 1).reshape(Co, Cd4).astype(bf16)
    wu_mat = wu.transpose(2, 3, 1, 0).reshape(4 * Co, Cu).astype(bf16)  # (p,q,co)
    w3_mat = jnp.pad(w3.transpose(0, 2, 3, 1),                # (Co, 3, 3, C3)
                     ((0, 0), (0, 0), (0, 0), (0, C3p - C3))
                     ).reshape(Co, 9 * C3p).astype(bf16)      # cols = (tap, c3p)
    bd_col = bd.reshape(Co, 1).astype(f32)
    bu_col = bu.reshape(Co, 1).astype(f32)
    b3_col = b3.reshape(Co, 1).astype(f32)

    # ---- precomputed geometry: depth-to-space 0/1 scatter matrices (bf16) and
    #      combined row+column boundary masks for the 3x3 taps (f32) ----------
    s_idx = jnp.arange(S, dtype=jnp.int32)
    sq = jnp.arange(Sq, dtype=jnp.int32)
    ii, jj = sq // Wh, sq % Wh
    scat = jnp.stack(
        [(s_idx[None, :] == ((2 * ii + p) * W + 2 * jj + q)[:, None])
         for p in range(2) for q in range(2)]).astype(bf16)           # (4, Sq, S)

    row, col = s_idx // W, s_idx % W
    masks = []
    for dy in range(3):
        for dx in range(3):
            ok = jnp.ones((S,), f32)
            if dy == 0:
                ok = ok * (row >= 1)
            if dy == 2:
                ok = ok * (row <= H - 2)
            if dx == 0:
                ok = ok * (col >= 1)
            if dx == 2:
                ok = ok * (col <= W - 2)
            masks.append(ok)
    mask_arr = jnp.stack(masks)                                        # (9, S)

    kernel = _make_kernel(Co, W, S, C3p)
    # TODO(synk): for very large H*W add an H-tiled grid axis with a 1-row halo
    # (v7x VMEM), and for large N fold several images onto the lane axis per
    # grid step to amortize per-step overhead; unnecessary at these sizes.
    out = pl.pallas_call(
        kernel,
        out_shape=jax.ShapeDtypeStruct((N, Co, S), f32),
        grid_spec=pltpu.PrefetchScalarGridSpec(
            num_scalar_prefetch=0,
            grid=(N,),
            in_specs=[
                pl.BlockSpec((1, Cd4, S), lambda n: (n, 0, 0)),
                pl.BlockSpec((1, Co, S), lambda n: (n, 0, 0)),
                pl.BlockSpec((1, Cu, Sq), lambda n: (n, 0, 0)),
                pl.BlockSpec((Co, Cd4), lambda n: (0, 0)),
                pl.BlockSpec((Co, 1), lambda n: (0, 0)),
                pl.BlockSpec((4 * Co, Cu), lambda n: (0, 0)),
                pl.BlockSpec((Co, 1), lambda n: (0, 0)),
                pl.BlockSpec((Co, 9 * C3p), lambda n: (0, 0)),
                pl.BlockSpec((Co, 1), lambda n: (0, 0)),
                pl.BlockSpec((4, Sq, S), lambda n: (0, 0, 0)),
                pl.BlockSpec((9, S), lambda n: (0, 0)),
            ],
            out_specs=pl.BlockSpec((1, Co, S), lambda n: (n, 0, 0)),
            scratch_shapes=[
                pltpu.VMEM((9 * C3p, S), jnp.bfloat16),   # stacked conv taps
            ]),
        compiler_params=pltpu.CompilerParams(
            dimension_semantics=("parallel",),
            vmem_limit_bytes=32 * 1024 * 1024),
    )(x1s, x2f, x3f, wd_mat, bd_col, wu_mat, bu_col, w3_mat, b3_col,
      scat, mask_arr)

    return out.reshape(N, Co, H, W)


def _reference(x1, x2, x3, params):
    """Pure-JAX reference mirroring the PyTorch forward (NCHW, fp32)."""
    wd, bd, wu, bu, w3, b3 = (params[k] for k in
                              ("wd", "bd", "wu", "bu", "w3", "b3"))
    dn = ("NCHW", "OIHW", "NCHW")
    down = lax.conv_general_dilated(x1, wd, (2, 2), "VALID",
                                    dimension_numbers=dn) + bd[None, :, None, None]
    N, _, Hh, Wh = x3.shape
    Co = wu.shape[1]
    up = jnp.einsum("nchw,cokl->nohkwl", x3, wu).reshape(N, Co, 2 * Hh, 2 * Wh)
    up = up + bu[None, :, None, None]
    merged = jnp.concatenate([down, x2, up], axis=1)
    out = lax.conv_general_dilated(merged, w3, (1, 1), ((1, 1), (1, 1)),
                                   dimension_numbers=dn) + b3[None, :, None, None]
    return out


def _run_case(key, N, Cd, Cu, Co, H, W, params):
    ks = jax.random.split(key, 3)
    x1 = jax.random.normal(ks[0], (N, Cd, 2 * H, 2 * W), jnp.float32)
    x2 = jax.random.normal(ks[1], (N, Co, H, W), jnp.float32)
    x3 = jax.random.normal(ks[2], (N, Cu, H // 2, W // 2), jnp.float32)

    out = jax.jit(merge_c2f_t_c_forward)(x1, x2, x3, params)
    out = jax.block_until_ready(out)
    ref = _reference(x1, x2, x3, params)
    assert out.shape == (N, Co, H, W), out.shape
    err = float(jnp.max(jnp.abs(out - ref)))
    # bf16 operands (fp32 accumulation) on every matmul path + bf16 patch, so a
    # looser tolerance than pure fp32; real bugs produce O(1) errors.
    assert err < 1e-1, err
    return err


if __name__ == "__main__":
    key = jax.random.PRNGKey(0)
    kp = jax.random.split(key, 7)
    N, Cd, Cu, Co = 2, 4, 4, 8          # down_channels, up_channels, out_channels

    params = {
        "wd": 0.1 * jax.random.normal(kp[0], (Co, Cd, 2, 2), jnp.float32),
        "bd": 0.1 * jax.random.normal(kp[1], (Co,), jnp.float32),
        "wu": 0.1 * jax.random.normal(kp[2], (Cu, Co, 2, 2), jnp.float32),
        "bu": 0.1 * jax.random.normal(kp[3], (Co,), jnp.float32),
        "w3": 0.1 * jax.random.normal(kp[4], (Co, 3 * Co, 3, 3), jnp.float32),
        "b3": 0.1 * jax.random.normal(kp[5], (Co,), jnp.float32),
    }

    _run_case(kp[6], N, Cd, Cu, Co, H=16, W=16, params=params)   # square
    _run_case(kp[6], N, Cd, Cu, Co, H=8, W=16, params=params)    # H != W
    print("KERNEL_OK")
</pallas_src>

<mosaic_0001>
module attributes {stable_mosaic.version = 11 : i64} {
  func.func @kernel(%arg0: i32, %arg1: memref<1x16x256xbf16, #tpu.memory_space<vmem>>, %arg2: memref<1x8x256xbf16, #tpu.memory_space<vmem>>, %arg3: memref<1x4x64xbf16, #tpu.memory_space<vmem>>, %arg4: memref<8x16xbf16, #tpu.memory_space<vmem>>, %arg5: memref<8x1xf32, #tpu.memory_space<vmem>>, %arg6: memref<32x4xbf16, #tpu.memory_space<vmem>>, %arg7: memref<8x1xf32, #tpu.memory_space<vmem>>, %arg8: memref<8x288xbf16, #tpu.memory_space<vmem>>, %arg9: memref<8x1xf32, #tpu.memory_space<vmem>>, %arg10: memref<4x64x256xbf16, #tpu.memory_space<vmem>>, %arg11: memref<9x256xf32, #tpu.memory_space<vmem>>, %arg12: memref<1x8x256xf32, #tpu.memory_space<vmem>>, %arg13: memref<288x256xbf16, #tpu.memory_space<vmem>>) attributes {dimension_semantics = [#tpu.dimension_semantics<parallel>], iteration_bounds = array<i64: 2>, scalar_prefetch = 0 : i64, scratch_operands = 1 : i64, tpu.core_type = #tpu.core_type<tc>, window_params = [{transform_indices = @transform_0, window_bounds = array<i64: 1, 16, 256>}, {transform_indices = @transform_1, window_bounds = array<i64: 1, 8, 256>}, {transform_indices = @transform_2, window_bounds = array<i64: 1, 4, 64>}, {pipeline_mode = #tpu.pipeline_mode<synchronous>, transform_indices = @transform_3, window_bounds = array<i64: 8, 16>}, {pipeline_mode = #tpu.pipeline_mode<synchronous>, transform_indices = @transform_4, window_bounds = array<i64: 8, 1>}, {pipeline_mode = #tpu.pipeline_mode<synchronous>, transform_indices = @transform_5, window_bounds = array<i64: 32, 4>}, {pipeline_mode = #tpu.pipeline_mode<synchronous>, transform_indices = @transform_6, window_bounds = array<i64: 8, 1>}, {pipeline_mode = #tpu.pipeline_mode<synchronous>, transform_indices = @transform_7, window_bounds = array<i64: 8, 288>}, {pipeline_mode = #tpu.pipeline_mode<synchronous>, transform_indices = @transform_8, window_bounds = array<i64: 8, 1>}, {pipeline_mode = #tpu.pipeline_mode<synchronous>, transform_indices = @transform_9, window_bounds = array<i64: 4, 64, 256>}, {pipeline_mode = #tpu.pipeline_mode<synchronous>, transform_indices = @transform_10, window_bounds = array<i64: 9, 256>}, {transform_indices = @transform_11, window_bounds = array<i64: 1, 8, 256>}]} {
    %c0 = arith.constant 0 : index
    %c0_0 = arith.constant 0 : index
    %0 = vector.load %arg4[%c0, %c0_0] : memref<8x16xbf16, #tpu.memory_space<vmem>>, vector<8x16xbf16>
    %c0_1 = arith.constant 0 : index
    %c0_2 = arith.constant 0 : index
    %c0_3 = arith.constant 0 : index
    %1 = vector.load %arg1[%c0_1, %c0_2, %c0_3] : memref<1x16x256xbf16, #tpu.memory_space<vmem>>, vector<1x16x256xbf16>
    %2 = vector.shape_cast %1 : vector<1x16x256xbf16> to vector<16x256xbf16>
    %cst = arith.constant dense<0.000000e+00> : vector<8x256xf32>
    %3 = tpu.matmul %0, %2, %cst {dimension_numbers = #tpu.dot_dimension_numbers<[1], [0], [0], [1], [0, 0, 1, 1], [], []>} : vector<8x16xbf16>, vector<16x256xbf16>, vector<8x256xf32> -> vector<8x256xf32>
    %c0_4 = arith.constant 0 : index
    %c0_5 = arith.constant 0 : index
    %4 = vector.load %arg5[%c0_4, %c0_5] : memref<8x1xf32, #tpu.memory_space<vmem>>, vector<8x1xf32>
    %5 = vector.broadcast %4 : vector<8x1xf32> to vector<8x256xf32>
    %6 = arith.addf %3, %5 : vector<8x256xf32>
    %c0_6 = arith.constant 0 : index
    %c0_7 = arith.constant 0 : index
    %7 = vector.load %arg6[%c0_6, %c0_7] : memref<32x4xbf16, #tpu.memory_space<vmem>>, vector<32x4xbf16>
    %c0_8 = arith.constant 0 : index
    %c0_9 = arith.constant 0 : index
    %c0_10 = arith.constant 0 : index
    %8 = vector.load %arg3[%c0_8, %c0_9, %c0_10] : memref<1x4x64xbf16, #tpu.memory_space<vmem>>, vector<1x4x64xbf16>
    %9 = vector.shape_cast %8 : vector<1x4x64xbf16> to vector<4x64xbf16>
    %cst_11 = arith.constant dense<0.000000e+00> : vector<32x64xf32>
    %10 = tpu.matmul %7, %9, %cst_11 {dimension_numbers = #tpu.dot_dimension_numbers<[1], [0], [0], [1], [0, 0, 1, 1], [], []>} : vector<32x4xbf16>, vector<4x64xbf16>, vector<32x64xf32> -> vector<32x64xf32>
    %11 = vector.extract_strided_slice %10 {offsets = [0, 0], sizes = [8, 64], strides = [1, 1]} : vector<32x64xf32> to vector<8x64xf32>
    %12 = arith.truncf %11 : vector<8x64xf32> to vector<8x64xbf16>
    %c0_12 = arith.constant 0 : index
    %c0_13 = arith.constant 0 : index
    %c0_14 = arith.constant 0 : index
    %13 = vector.load %arg10[%c0_12, %c0_13, %c0_14] : memref<4x64x256xbf16, #tpu.memory_space<vmem>>, vector<1x64x256xbf16>
    %14 = vector.shape_cast %13 : vector<1x64x256xbf16> to vector<64x256xbf16>
    %cst_15 = arith.constant dense<0.000000e+00> : vector<8x256xf32>
    %15 = tpu.matmul %12, %14, %cst_15 {dimension_numbers = #tpu.dot_dimension_numbers<[1], [0], [0], [1], [0, 0, 1, 1], [], []>} : vector<8x64xbf16>, vector<64x256xbf16>, vector<8x256xf32> -> vector<8x256xf32>
    %16 = vector.extract_strided_slice %10 {offsets = [8, 0], sizes = [8, 64], strides = [1, 1]} : vector<32x64xf32> to vector<8x64xf32>
    %17 = arith.truncf %16 : vector<8x64xf32> to vector<8x64xbf16>
    %c1 = arith.constant 1 : index
    %c0_16 = arith.constant 0 : index
    %c0_17 = arith.constant 0 : index
    %18 = vector.load %arg10[%c1, %c0_16, %c0_17] : memref<4x64x256xbf16, #tpu.memory_space<vmem>>, vector<1x64x256xbf16>
    %19 = vector.shape_cast %18 : vector<1x64x256xbf16> to vector<64x256xbf16>
    %cst_18 = arith.constant dense<0.000000e+00> : vector<8x256xf32>
    %20 = tpu.matmul %17, %19, %cst_18 {dimension_numbers = #tpu.dot_dimension_numbers<[1], [0], [0], [1], [0, 0, 1, 1], [], []>} : vector<8x64xbf16>, vector<64x256xbf16>, vector<8x256xf32> -> vector<8x256xf32>
    %21 = arith.addf %15, %20 : vector<8x256xf32>
    %22 = vector.extract_strided_slice %10 {offsets = [16, 0], sizes = [8, 64], strides = [1, 1]} : vector<32x64xf32> to vector<8x64xf32>
    %23 = arith.truncf %22 : vector<8x64xf32> to vector<8x64xbf16>
    %c2 = arith.constant 2 : index
    %c0_19 = arith.constant 0 : index
    %c0_20 = arith.constant 0 : index
    %24 = vector.load %arg10[%c2, %c0_19, %c0_20] : memref<4x64x256xbf16, #tpu.memory_space<vmem>>, vector<1x64x256xbf16>
    %25 = vector.shape_cast %24 : vector<1x64x256xbf16> to vector<64x256xbf16>
    %cst_21 = arith.constant dense<0.000000e+00> : vector<8x256xf32>
    %26 = tpu.matmul %23, %25, %cst_21 {dimension_numbers = #tpu.dot_dimension_numbers<[1], [0], [0], [1], [0, 0, 1, 1], [], []>} : vector<8x64xbf16>, vector<64x256xbf16>, vector<8x256xf32> -> vector<8x256xf32>
    %27 = arith.addf %21, %26 : vector<8x256xf32>
    %28 = vector.extract_strided_slice %10 {offsets = [24, 0], sizes = [8, 64], strides = [1, 1]} : vector<32x64xf32> to vector<8x64xf32>
    %29 = arith.truncf %28 : vector<8x64xf32> to vector<8x64xbf16>
    %c3 = arith.constant 3 : index
    %c0_22 = arith.constant 0 : index
    %c0_23 = arith.constant 0 : index
    %30 = vector.load %arg10[%c3, %c0_22, %c0_23] : memref<4x64x256xbf16, #tpu.memory_space<vmem>>, vector<1x64x256xbf16>
    %31 = vector.shape_cast %30 : vector<1x64x256xbf16> to vector<64x256xbf16>
    %cst_24 = arith.constant dense<0.000000e+00> : vector<8x256xf32>
    %32 = tpu.matmul %29, %31, %cst_24 {dimension_numbers = #tpu.dot_dimension_numbers<[1], [0], [0], [1], [0, 0, 1, 1], [], []>} : vector<8x64xbf16>, vector<64x256xbf16>, vector<8x256xf32> -> vector<8x256xf32>
    %33 = arith.addf %27, %32 : vector<8x256xf32>
    %c0_25 = arith.constant 0 : index
    %c0_26 = arith.constant 0 : index
    %34 = vector.load %arg7[%c0_25, %c0_26] : memref<8x1xf32, #tpu.memory_space<vmem>>, vector<8x1xf32>
    %35 = vector.broadcast %34 : vector<8x1xf32> to vector<8x256xf32>
    %36 = arith.addf %33, %35 : vector<8x256xf32>
    %c0_27 = arith.constant 0 : index
    %c0_28 = arith.constant 0 : index
    %c0_29 = arith.constant 0 : index
    %37 = vector.load %arg2[%c0_27, %c0_28, %c0_29] : memref<1x8x256xbf16, #tpu.memory_space<vmem>>, vector<1x8x256xbf16>
    %38 = vector.shape_cast %37 : vector<1x8x256xbf16> to vector<8x256xbf16>
    %39 = arith.extf %38 : vector<8x256xbf16> to vector<8x256xf32>
    %cst_30 = arith.constant 0.000000e+00 : f32
    %40 = vector.broadcast %cst_30 : f32 to vector<8x256xf32>
    %41 = tpu.concatenate %6, %39, %36, %40 in 0 : vector<8x256xf32>, vector<8x256xf32>, vector<8x256xf32>, vector<8x256xf32> -> vector<32x256xf32>
    %c17_i32 = arith.constant 17 : i32
    %42 = tpu.dynamic_rotate %41 by %c17_i32 dim 1 : vector<32x256xf32>, i32 -> vector<32x256xf32>
    %c0_31 = arith.constant 0 : index
    %c0_32 = arith.constant 0 : index
    %43 = vector.load %arg11[%c0_31, %c0_32] : memref<9x256xf32, #tpu.memory_space<vmem>>, vector<1x256xf32>
    %44 = vector.broadcast %43 : vector<1x256xf32> to vector<32x256xf32>
    %45 = arith.mulf %42, %44 : vector<32x256xf32>
    %46 = arith.truncf %45 : vector<32x256xf32> to vector<32x256xbf16>
    %c0_33 = arith.constant 0 : index
    %c0_34 = arith.constant 0 : index
    %47 = vector.load %arg13[%c0_33, %c0_34] : memref<288x256xbf16, #tpu.memory_space<vmem>>, vector<32x256xbf16>
    tpu.vector_store %arg13[%c0_33, %c0_34], %46 {strides = array<i32>} : memref<288x256xbf16, #tpu.memory_space<vmem>>, vector<32x256xbf16>,
    %c16_i32 = arith.constant 16 : i32
    %48 = tpu.dynamic_rotate %41 by %c16_i32 dim 1 : vector<32x256xf32>, i32 -> vector<32x256xf32>
    %c1_35 = arith.constant 1 : index
    %c0_36 = arith.constant 0 : index
    %49 = vector.load %arg11[%c1_35, %c0_36] : memref<9x256xf32, #tpu.memory_space<vmem>>, vector<1x256xf32>
    %50 = vector.broadcast %49 : vector<1x256xf32> to vector<32x256xf32>
    %51 = arith.mulf %48, %50 : vector<32x256xf32>
    %52 = arith.truncf %51 : vector<32x256xf32> to vector<32x256xbf16>
    %c32 = arith.constant 32 : index
    %c0_37 = arith.constant 0 : index
    %53 = vector.load %arg13[%c32, %c0_37] : memref<288x256xbf16, #tpu.memory_space<vmem>>, vector<32x256xbf16>
    tpu.vector_store %arg13[%c32, %c0_37], %52 {strides = array<i32>} : memref<288x256xbf16, #tpu.memory_space<vmem>>, vector<32x256xbf16>,
    %c15_i32 = arith.constant 15 : i32
    %54 = tpu.dynamic_rotate %41 by %c15_i32 dim 1 : vector<32x256xf32>, i32 -> vector<32x256xf32>
    %c2_38 = arith.constant 2 : index
    %c0_39 = arith.constant 0 : index
    %55 = vector.load %arg11[%c2_38, %c0_39] : memref<9x256xf32, #tpu.memory_space<vmem>>, vector<1x256xf32>
    %56 = vector.broadcast %55 : vector<1x256xf32> to vector<32x256xf32>
    %57 = arith.mulf %54, %56 : vector<32x256xf32>
    %58 = arith.truncf %57 : vector<32x256xf32> to vector<32x256xbf16>
    %c64 = arith.constant 64 : index
    %c0_40 = arith.constant 0 : index
    %59 = vector.load %arg13[%c64, %c0_40] : memref<288x256xbf16, #tpu.memory_space<vmem>>, vector<32x256xbf16>
    tpu.vector_store %arg13[%c64, %c0_40], %58 {strides = array<i32>} : memref<288x256xbf16, #tpu.memory_space<vmem>>, vector<32x256xbf16>,
    %c1_i32 = arith.constant 1 : i32
    %60 = tpu.dynamic_rotate %41 by %c1_i32 dim 1 : vector<32x256xf32>, i32 -> vector<32x256xf32>
    %c3_41 = arith.constant 3 : index
    %c0_42 = arith.constant 0 : index
    %61 = vector.load %arg11[%c3_41, %c0_42] : memref<9x256xf32, #tpu.memory_space<vmem>>, vector<1x256xf32>
    %62 = vector.broadcast %61 : vector<1x256xf32> to vector<32x256xf32>
    %63 = arith.mulf %60, %62 : vector<32x256xf32>
    %64 = arith.truncf %63 : vector<32x256xf32> to vector<32x256xbf16>
    %c96 = arith.constant 96 : index
    %c0_43 = arith.constant 0 : index
    %65 = vector.load %arg13[%c96, %c0_43] : memref<288x256xbf16, #tpu.memory_space<vmem>>, vector<32x256xbf16>
    tpu.vector_store %arg13[%c96, %c0_43], %64 {strides = array<i32>} : memref<288x256xbf16, #tpu.memory_space<vmem>>, vector<32x256xbf16>,
    %66 = arith.truncf %41 : vector<32x256xf32> to vector<32x256xbf16>
    %c128 = arith.constant 128 : index
    %c0_44 = arith.constant 0 : index
    %67 = vector.load %arg13[%c128, %c0_44] : memref<288x256xbf16, #tpu.memory_space<vmem>>, vector<32x256xbf16>
    tpu.vector_store %arg13[%c128, %c0_44], %66 {strides = array<i32>} : memref<288x256xbf16, #tpu.memory_space<vmem>>, vector<32x256xbf16>,
    %c255_i32 = arith.constant 255 : i32
    %68 = tpu.dynamic_rotate %41 by %c255_i32 dim 1 : vector<32x256xf32>, i32 -> vector<32x256xf32>
    %c5 = arith.constant 5 : index
    %c0_45 = arith.constant 0 : index
    %69 = vector.load %arg11[%c5, %c0_45] : memref<9x256xf32, #tpu.memory_space<vmem>>, vector<1x256xf32>
    %70 = vector.broadcast %69 : vector<1x256xf32> to vector<32x256xf32>
    %71 = arith.mulf %68, %70 : vector<32x256xf32>
    %72 = arith.truncf %71 : vector<32x256xf32> to vector<32x256xbf16>
    %c160 = arith.constant 160 : index
    %c0_46 = arith.constant 0 : index
    %73 = vector.load %arg13[%c160, %c0_46] : memref<288x256xbf16, #tpu.memory_space<vmem>>, vector<32x256xbf16>
    tpu.vector_store %arg13[%c160, %c0_46], %72 {strides = array<i32>} : memref<288x256xbf16, #tpu.memory_space<vmem>>, vector<32x256xbf16>,
    %c241_i32 = arith.constant 241 : i32
    %74 = tpu.dynamic_rotate %41 by %c241_i32 dim 1 : vector<32x256xf32>, i32 -> vector<32x256xf32>
    %c6 = arith.constant 6 : index
    %c0_47 = arith.constant 0 : index
    %75 = vector.load %arg11[%c6, %c0_47] : memref<9x256xf32, #tpu.memory_space<vmem>>, vector<1x256xf32>
    %76 = vector.broadcast %75 : vector<1x256xf32> to vector<32x256xf32>
    %77 = arith.mulf %74, %76 : vector<32x256xf32>
    %78 = arith.truncf %77 : vector<32x256xf32> to vector<32x256xbf16>
    %c192 = arith.constant 192 : index
    %c0_48 = arith.constant 0 : index
    %79 = vector.load %arg13[%c192, %c0_48] : memref<288x256xbf16, #tpu.memory_space<vmem>>, vector<32x256xbf16>
    tpu.vector_store %arg13[%c192, %c0_48], %78 {strides = array<i32>} : memref<288x256xbf16, #tpu.memory_space<vmem>>, vector<32x256xbf16>,
    %c240_i32 = arith.constant 240 : i32
    %80 = tpu.dynamic_rotate %41 by %c240_i32 dim 1 : vector<32x256xf32>, i32 -> vector<32x256xf32>
    %c7 = arith.constant 7 : index
    %c0_49 = arith.constant 0 : index
    %81 = vector.load %arg11[%c7, %c0_49] : memref<9x256xf32, #tpu.memory_space<vmem>>, vector<1x256xf32>
    %82 = vector.broadcast %81 : vector<1x256xf32> to vector<32x256xf32>
    %83 = arith.mulf %80, %82 : vector<32x256xf32>
    %84 = arith.truncf %83 : vector<32x256xf32> to vector<32x256xbf16>
    %c224 = arith.constant 224 : index
    %c0_50 = arith.constant 0 : index
    %85 = vector.load %arg13[%c224, %c0_50] : memref<288x256xbf16, #tpu.memory_space<vmem>>, vector<32x256xbf16>
    tpu.vector_store %arg13[%c224, %c0_50], %84 {strides = array<i32>} : memref<288x256xbf16, #tpu.memory_space<vmem>>, vector<32x256xbf16>,
    %c239_i32 = arith.constant 239 : i32
    %86 = tpu.dynamic_rotate %41 by %c239_i32 dim 1 : vector<32x256xf32>, i32 -> vector<32x256xf32>
    %c8 = arith.constant 8 : index
    %c0_51 = arith.constant 0 : index
    %87 = vector.load %arg11[%c8, %c0_51] : memref<9x256xf32, #tpu.memory_space<vmem>>, vector<1x256xf32>
    %88 = vector.broadcast %87 : vector<1x256xf32> to vector<32x256xf32>
    %89 = arith.mulf %86, %88 : vector<32x256xf32>
    %90 = arith.truncf %89 : vector<32x256xf32> to vector<32x256xbf16>
    %c256 = arith.constant 256 : index
    %c0_52 = arith.constant 0 : index
    %91 = vector.load %arg13[%c256, %c0_52] : memref<288x256xbf16, #tpu.memory_space<vmem>>, vector<32x256xbf16>
    tpu.vector_store %arg13[%c256, %c0_52], %90 {strides = array<i32>} : memref<288x256xbf16, #tpu.memory_space<vmem>>, vector<32x256xbf16>,
    %c0_53 = arith.constant 0 : index
    %c0_54 = arith.constant 0 : index
    %92 = vector.load %arg8[%c0_53, %c0_54] : memref<8x288xbf16, #tpu.memory_space<vmem>>, vector<8x288xbf16>
    %c0_55 = arith.constant 0 : index
    %c0_56 = arith.constant 0 : index
    %93 = vector.load %arg13[%c0_55, %c0_56] : memref<288x256xbf16, #tpu.memory_space<vmem>>, vector<288x256xbf16>
    %cst_57 = arith.constant dense<0.000000e+00> : vector<8x256xf32>
    %94 = tpu.matmul %92, %93, %cst_57 {dimension_numbers = #tpu.dot_dimension_numbers<[1], [0], [0], [1], [0, 0, 1, 1], [], []>} : vector<8x288xbf16>, vector<288x256xbf16>, vector<8x256xf32> -> vector<8x256xf32>
    %c0_58 = arith.constant 0 : index
    %c0_59 = arith.constant 0 : index
    %95 = vector.load %arg9[%c0_58, %c0_59] : memref<8x1xf32, #tpu.memory_space<vmem>>, vector<8x1xf32>
    %96 = vector.broadcast %95 : vector<8x1xf32> to vector<8x256xf32>
    %97 = arith.addf %94, %96 : vector<8x256xf32>
    %c0_60 = arith.constant 0 : index
    %c0_61 = arith.constant 0 : index
    %c0_62 = arith.constant 0 : index
    %98 = vector.load %arg12[%c0_60, %c0_61, %c0_62] : memref<1x8x256xf32, #tpu.memory_space<vmem>>, vector<1x8x256xf32>
    %99 = vector.shape_cast %98 : vector<1x8x256xf32> to vector<8x256xf32>
    %100 = vector.shape_cast %97 : vector<8x256xf32> to vector<1x8x256xf32>
    tpu.vector_store %arg12[%c0_60, %c0_61, %c0_62], %100 {strides = array<i32>} : memref<1x8x256xf32, #tpu.memory_space<vmem>>, vector<1x8x256xf32>,
    return
  }
  func.func @transform_0(%arg0: i32) -> (i32, i32, i32) {
    %c0_i32 = arith.constant 0 : i32
    %c0_i32_0 = arith.constant 0 : i32
    %c0_i32_1 = arith.constant 0 : i32
    return %arg0, %c0_i32, %c0_i32_0 : i32, i32, i32
  }
  func.func @transform_1(%arg0: i32) -> (i32, i32, i32) {
    %c0_i32 = arith.constant 0 : i32
    %c0_i32_0 = arith.constant 0 : i32
    %c0_i32_1 = arith.constant 0 : i32
    return %arg0, %c0_i32, %c0_i32_0 : i32, i32, i32
  }
  func.func @transform_2(%arg0: i32) -> (i32, i32, i32) {
    %c0_i32 = arith.constant 0 : i32
    %c0_i32_0 = arith.constant 0 : i32
    %c0_i32_1 = arith.constant 0 : i32
    return %arg0, %c0_i32, %c0_i32_0 : i32, i32, i32
  }
  func.func @transform_3(%arg0: i32) -> (i32, i32) {
    %c0_i32 = arith.constant 0 : i32
    %c0_i32_0 = arith.constant 0 : i32
    %c0_i32_1 = arith.constant 0 : i32
    return %c0_i32, %c0_i32_0 : i32, i32
  }
  func.func @transform_4(%arg0: i32) -> (i32, i32) {
    %c0_i32 = arith.constant 0 : i32
    %c0_i32_0 = arith.constant 0 : i32
    %c0_i32_1 = arith.constant 0 : i32
    return %c0_i32, %c0_i32_0 : i32, i32
  }
  func.func @transform_5(%arg0: i32) -> (i32, i32) {
    %c0_i32 = arith.constant 0 : i32
    %c0_i32_0 = arith.constant 0 : i32
    %c0_i32_1 = arith.constant 0 : i32
    return %c0_i32, %c0_i32_0 : i32, i32
  }
  func.func @transform_6(%arg0: i32) -> (i32, i32) {
    %c0_i32 = arith.constant 0 : i32
    %c0_i32_0 = arith.constant 0 : i32
    %c0_i32_1 = arith.constant 0 : i32
    return %c0_i32, %c0_i32_0 : i32, i32
  }
  func.func @transform_7(%arg0: i32) -> (i32, i32) {
    %c0_i32 = arith.constant 0 : i32
    %c0_i32_0 = arith.constant 0 : i32
    %c0_i32_1 = arith.constant 0 : i32
    return %c0_i32, %c0_i32_0 : i32, i32
  }
  func.func @transform_8(%arg0: i32) -> (i32, i32) {
    %c0_i32 = arith.constant 0 : i32
    %c0_i32_0 = arith.constant 0 : i32
    %c0_i32_1 = arith.constant 0 : i32
    return %c0_i32, %c0_i32_0 : i32, i32
  }
  func.func @transform_9(%arg0: i32) -> (i32, i32, i32) {
    %c0_i32 = arith.constant 0 : i32
    %c0_i32_0 = arith.constant 0 : i32
    %c0_i32_1 = arith.constant 0 : i32
    %c0_i32_2 = arith.constant 0 : i32
    return %c0_i32, %c0_i32_0, %c0_i32_1 : i32, i32, i32
  }
  func.func @transform_10(%arg0: i32) -> (i32, i32) {
    %c0_i32 = arith.constant 0 : i32
    %c0_i32_0 = arith.constant 0 : i32
    %c0_i32_1 = arith.constant 0 : i32
    return %c0_i32, %c0_i32_0 : i32, i32
  }
  func.func @transform_11(%arg0: i32) -> (i32, i32, i32) {
    %c0_i32 = arith.constant 0 : i32
    %c0_i32_0 = arith.constant 0 : i32
    %c0_i32_1 = arith.constant 0 : i32
    return %arg0, %c0_i32, %c0_i32_0 : i32, i32, i32
  }
}

</mosaic_0001>

<llo_original>
// kernel: merge_c2f_t_c_forward.1
$region0: #{merge_c2f_t_c_forward.1}
  #allocation0 [shape = 'u32[]', space=smem, size = 0x4, offset = 0x4, fixed_abs, tag = 'smem constant byte address 0x4 - core index']
  #allocation1 [shape = 'u32[144,128]{1,0:T(1,128)}', space=vmem, size = 0x12000, scoped, tag = 'internal scratch']
  #allocation2 [shape = 'bf16[288,256]{1,0:T(16,128)(2,1)}', space=vmem, size = 0x24000, scoped, tag = 'scratch operand']
  %s0 = inlined_call_operand.vmem [shape: bf16[2,16,256], index: 0, kind: input, shape index: {}]
  %s1 = inlined_call_operand.vmem [shape: bf16[2,8,256], index: 1, kind: input, shape index: {}]
  %s2 = inlined_call_operand.vmem [shape: bf16[2,4,64], index: 2, kind: input, shape index: {}]
  %s3 = inlined_call_operand.vmem [shape: bf16[8,16], index: 3, kind: input, shape index: {}]
  %s4 = inlined_call_operand.vmem [shape: f32[8,1], index: 4, kind: input, shape index: {}]
  %s5 = inlined_call_operand.vmem [shape: bf16[32,4], index: 5, kind: input, shape index: {}]
  %s6 = inlined_call_operand.vmem [shape: f32[8,1], index: 6, kind: input, shape index: {}]
  %s7 = inlined_call_operand.vmem [shape: bf16[8,288], index: 7, kind: input, shape index: {}]
  %s8 = inlined_call_operand.vmem [shape: f32[8,1], index: 8, kind: input, shape index: {}]
  %s9 = inlined_call_operand.vmem [shape: bf16[4,64,256], index: 9, kind: input, shape index: {}]
  %s10 = inlined_call_operand.vmem [shape: f32[9,256], index: 10, kind: input, shape index: {}]
  %s11 = inlined_call_operand.vmem [shape: f32[2,8,256], index: 11, kind: output, shape index: {}]
  %s12 = sld [smem:[#allocation0]]
  $region77: #{merge_c2f_t_c_forward.1} parent=0
    _
  %s14 = ssub.s32 1, %s12
  %s15 = scalar_select 0, %s14, %s12
  loop: start=0, step=1, limit=4
  $region2: #{merge_c2f_t_c_forward.1} parent=0 // loop_pre_header
    _
  $region3: #{merge_c2f_t_c_forward.1} parent=0 // loop_header
    %s17 = sphi 0, %s21
    %p18 = scmp.ge.s32.totalorder %s17, 4
    %s27 = sphi 0, %s29
    %s30 = sphi 0, %s27
    %s31 = sphi 0, %s30
    %s47 = sphi 0, %s31
    %s53 = sphi 0, %s55
    %s56 = sphi 0, %s53
    %s57 = sphi 0, %s56
    %s73 = sphi 0, %s57
    %s79 = sphi 0, %s81
    %s82 = sphi 0, %s79
    %s83 = sphi 0, %s82
    %s99 = sphi 0, %s83
    %s103 = sphi 0, %s103
    %s105 = sphi 0, %s103
    %s106 = sphi 0, %s105
    %s120 = sphi 0, %s106
    %s124 = sphi 0, %s124
    %s126 = sphi 0, %s124
    %s127 = sphi 0, %s126
    %s141 = sphi 0, %s127
    %s145 = sphi 0, %s145
    %s147 = sphi 0, %s145
    %s148 = sphi 0, %s147
    %s162 = sphi 0, %s148
    %s166 = sphi 0, %s166
    %s168 = sphi 0, %s166
    %s169 = sphi 0, %s168
    %s183 = sphi 0, %s169
    %s187 = sphi 0, %s187
    %s189 = sphi 0, %s187
    %s190 = sphi 0, %s189
    %s204 = sphi 0, %s190
    %s208 = sphi 0, %s208
    %s210 = sphi 0, %s208
    %s211 = sphi 0, %s210
    %s225 = sphi 0, %s211
    %s229 = sphi 0, %s229
    %s231 = sphi 0, %s229
    %s232 = sphi 0, %s231
    %s246 = sphi 0, %s232
    %s250 = sphi 0, %s250
    %s252 = sphi 0, %s250
    %s253 = sphi 0, %s252
    %s267 = sphi 0, %s253
    %s273 = sphi 0, %s275
    %s276 = sphi 0, %s273
    %s277 = sphi 0, %s276
    %s293 = sphi 0, %s277
  $region4: #{merge_c2f_t_c_forward.1} parent=0 // loop_header_branch
    %20 = sbr.rel (%p18) target = $region8
  $region5: #{merge_c2f_t_c_forward.1} parent=0 // loop_body
    %s22 = ssub.s32 %s17, 1
    %s23 = ssub.s32 %s17, 2
    %s24 = sadd.s32 %s17, 1
    %s25 = ssub.s32 %s17, %s24
    %p26 = scmp.eq.s32.totalorder %s25, 0
    %s28 = sadd.s32 %s27, 1
    %s29 = scalar_select %p26, %s27, %s28
    %p32 = pneg %p26
    %p33 = scmp.eq.s32.totalorder %s17, 1
    %p34 = por %p32, %p33
    %p35 = scmp.ne.s32.totalorder %s27, %s30
    %p36 = scmp.eq.s32.totalorder %s17, 0
    %p37 = por %p35, %p36
    %p38 = scmp.ne.s32.totalorder %s27, %s30
    %p39 = scmp.eq.s32.totalorder %s22, 1
    %p40 = por %p38, %p39
    %p41 = scmp.ne.s32.totalorder %s30, %s31
    %p42 = scmp.eq.s32.totalorder %s22, 0
    %p43 = por %p41, %p42
    %p44 = scmp.ne.s32.totalorder %s30, %s31
    %p45 = scmp.eq.s32.totalorder %s23, 1
    %p46 = por %p44, %p45
    %p48 = scmp.ne.s32.totalorder %s31, %s47
    %p49 = scmp.eq.s32.totalorder %s23, 0
    %p50 = por %p48, %p49
    %s51 = ssub.s32 %s17, %s24
    %p52 = scmp.eq.s32.totalorder %s51, 0
    %s54 = sadd.s32 %s53, 1
    %s55 = scalar_select %p52, %s53, %s54
    %p58 = pneg %p52
    %p59 = scmp.eq.s32.totalorder %s17, 1
    %p60 = por %p58, %p59
    %p61 = scmp.ne.s32.totalorder %s53, %s56
    %p62 = scmp.eq.s32.totalorder %s17, 0
    %p63 = por %p61, %p62
    %p64 = scmp.ne.s32.totalorder %s53, %s56
    %p65 = scmp.eq.s32.totalorder %s22, 1
    %p66 = por %p64, %p65
    %p67 = scmp.ne.s32.totalorder %s56, %s57
    %p68 = scmp.eq.s32.totalorder %s22, 0
    %p69 = por %p67, %p68
    %p70 = scmp.ne.s32.totalorder %s56, %s57
    %p71 = scmp.eq.s32.totalorder %s23, 1
    %p72 = por %p70, %p71
    %p74 = scmp.ne.s32.totalorder %s57, %s73
    %p75 = scmp.eq.s32.totalorder %s23, 0
    %p76 = por %p74, %p75
    %s77 = ssub.s32 %s17, %s24
    %p78 = scmp.eq.s32.totalorder %s77, 0
    %s80 = sadd.s32 %s79, 1
    %s81 = scalar_select %p78, %s79, %s80
    %p84 = pneg %p78
    %p85 = scmp.eq.s32.totalorder %s17, 1
    %p86 = por %p84, %p85
    %p87 = scmp.ne.s32.totalorder %s79, %s82
    %p88 = scmp.eq.s32.totalorder %s17, 0
    %p89 = por %p87, %p88
    %p90 = scmp.ne.s32.totalorder %s79, %s82
    %p91 = scmp.eq.s32.totalorder %s22, 1
    %p92 = por %p90, %p91
    %p93 = scmp.ne.s32.totalorder %s82, %s83
    %p94 = scmp.eq.s32.totalorder %s22, 0
    %p95 = por %p93, %p94
    %p96 = scmp.ne.s32.totalorder %s82, %s83
    %p97 = scmp.eq.s32.totalorder %s23, 1
    %p98 = por %p96, %p97
    %p100 = scmp.ne.s32.totalorder %s83, %s99
    %p101 = scmp.eq.s32.totalorder %s23, 0
    %p102 = por %p100, %p101
    %s104 = sadd.s32 %s103, 1
    %p107 = scmp.eq.s32.totalorder %s17, 1
    %p108 = scmp.ne.s32.totalorder %s103, %s105
    %p109 = scmp.eq.s32.totalorder %s17, 0
    %p110 = por %p108, %p109
    %p111 = scmp.ne.s32.totalorder %s103, %s105
    %p112 = scmp.eq.s32.totalorder %s22, 1
    %p113 = por %p111, %p112
    %p114 = scmp.ne.s32.totalorder %s105, %s106
    %p115 = scmp.eq.s32.totalorder %s22, 0
    %p116 = por %p114, %p115
    %p117 = scmp.ne.s32.totalorder %s105, %s106
    %p118 = scmp.eq.s32.totalorder %s23, 1
    %p119 = por %p117, %p118
    %p121 = scmp.ne.s32.totalorder %s106, %s120
    %p122 = scmp.eq.s32.totalorder %s23, 0
    %p123 = por %p121, %p122
    %s125 = sadd.s32 %s124, 1
    %p128 = scmp.eq.s32.totalorder %s17, 1
    %p129 = scmp.ne.s32.totalorder %s124, %s126
    %p130 = scmp.eq.s32.totalorder %s17, 0
    %p131 = por %p129, %p130
    %p132 = scmp.ne.s32.totalorder %s124, %s126
    %p133 = scmp.eq.s32.totalorder %s22, 1
    %p134 = por %p132, %p133
    %p135 = scmp.ne.s32.totalorder %s126, %s127
    %p136 = scmp.eq.s32.totalorder %s22, 0
    %p137 = por %p135, %p136
    %p138 = scmp.ne.s32.totalorder %s126, %s127
    %p139 = scmp.eq.s32.totalorder %s23, 1
    %p140 = por %p138, %p139
    %p142 = scmp.ne.s32.totalorder %s127, %s141
    %p143 = scmp.eq.s32.totalorder %s23, 0
    %p144 = por %p142, %p143
    %s146 = sadd.s32 %s145, 1
    %p149 = scmp.eq.s32.totalorder %s17, 1
    %p150 = scmp.ne.s32.totalorder %s145, %s147
    %p151 = scmp.eq.s32.totalorder %s17, 0
    %p152 = por %p150, %p151
    %p153 = scmp.ne.s32.totalorder %s145, %s147
    %p154 = scmp.eq.s32.totalorder %s22, 1
    %p155 = por %p153, %p154
    %p156 = scmp.ne.s32.totalorder %s147, %s148
    %p157 = scmp.eq.s32.totalorder %s22, 0
    %p158 = por %p156, %p157
    %p159 = scmp.ne.s32.totalorder %s147, %s148
    %p160 = scmp.eq.s32.totalorder %s23, 1
    %p161 = por %p159, %p160
    %p163 = scmp.ne.s32.totalorder %s148, %s162
    %p164 = scmp.eq.s32.totalorder %s23, 0
    %p165 = por %p163, %p164
    %s167 = sadd.s32 %s166, 1
    %p170 = scmp.eq.s32.totalorder %s17, 1
    %p171 = scmp.ne.s32.totalorder %s166, %s168
    %p172 = scmp.eq.s32.totalorder %s17, 0
    %p173 = por %p171, %p172
    %p174 = scmp.ne.s32.totalorder %s166, %s168
    %p175 = scmp.eq.s32.totalorder %s22, 1
    %p176 = por %p174, %p175
    %p177 = scmp.ne.s32.totalorder %s168, %s169
    %p178 = scmp.eq.s32.totalorder %s22, 0
    %p179 = por %p177, %p178
    %p180 = scmp.ne.s32.totalorder %s168, %s169
    %p181 = scmp.eq.s32.totalorder %s23, 1
    %p182 = por %p180, %p181
    %p184 = scmp.ne.s32.totalorder %s169, %s183
    %p185 = scmp.eq.s32.totalorder %s23, 0
    %p186 = por %p184, %p185
    %s188 = sadd.s32 %s187, 1
    %p191 = scmp.eq.s32.totalorder %s17, 1
    %p192 = scmp.ne.s32.totalorder %s187, %s189
    %p193 = scmp.eq.s32.totalorder %s17, 0
    %p194 = por %p192, %p193
    %p195 = scmp.ne.s32.totalorder %s187, %s189
    %p196 = scmp.eq.s32.totalorder %s22, 1
    %p197 = por %p195, %p196
    %p198 = scmp.ne.s32.totalorder %s189, %s190
    %p199 = scmp.eq.s32.totalorder %s22, 0
    %p200 = por %p198, %p199
    %p201 = scmp.ne.s32.totalorder %s189, %s190
    %p202 = scmp.eq.s32.totalorder %s23, 1
    %p203 = por %p201, %p202
    %p205 = scmp.ne.s32.totalorder %s190, %s204
    %p206 = scmp.eq.s32.totalorder %s23, 0
    %p207 = por %p205, %p206
    %s209 = sadd.s32 %s208, 1
    %p212 = scmp.eq.s32.totalorder %s17, 1
    %p213 = scmp.ne.s32.totalorder %s208, %s210
    %p214 = scmp.eq.s32.totalorder %s17, 0
    %p215 = por %p213, %p214
    %p216 = scmp.ne.s32.totalorder %s208, %s210
    %p217 = scmp.eq.s32.totalorder %s22, 1
    %p218 = por %p216, %p217
    %p219 = scmp.ne.s32.totalorder %s210, %s211
    %p220 = scmp.eq.s32.totalorder %s22, 0
    %p221 = por %p219, %p220
    %p222 = scmp.ne.s32.totalorder %s210, %s211
    %p223 = scmp.eq.s32.totalorder %s23, 1
    %p224 = por %p222, %p223
    %p226 = scmp.ne.s32.totalorder %s211, %s225
    %p227 = scmp.eq.s32.totalorder %s23, 0
    %p228 = por %p226, %p227
    %s230 = sadd.s32 %s229, 1
    %p233 = scmp.eq.s32.totalorder %s17, 1
    %p234 = scmp.ne.s32.totalorder %s229, %s231
    %p235 = scmp.eq.s32.totalorder %s17, 0
    %p236 = por %p234, %p235
    %p237 = scmp.ne.s32.totalorder %s229, %s231
    %p238 = scmp.eq.s32.totalorder %s22, 1
    %p239 = por %p237, %p238
    %p240 = scmp.ne.s32.totalorder %s231, %s232
    %p241 = scmp.eq.s32.totalorder %s22, 0
    %p242 = por %p240, %p241
    %p243 = scmp.ne.s32.totalorder %s231, %s232
    %p244 = scmp.eq.s32.totalorder %s23, 1
    %p245 = por %p243, %p244
    %p247 = scmp.ne.s32.totalorder %s232, %s246
    %p248 = scmp.eq.s32.totalorder %s23, 0
    %p249 = por %p247, %p248
    %s251 = sadd.s32 %s250, 1
    %p254 = scmp.eq.s32.totalorder %s17, 1
    %p255 = scmp.ne.s32.totalorder %s250, %s252
    %p256 = scmp.eq.s32.totalorder %s17, 0
    %p257 = por %p255, %p256
    %p258 = scmp.ne.s32.totalorder %s250, %s252
    %p259 = scmp.eq.s32.totalorder %s22, 1
    %p260 = por %p258, %p259
    %p261 = scmp.ne.s32.totalorder %s252, %s253
    %p262 = scmp.eq.s32.totalorder %s22, 0
    %p263 = por %p261, %p262
    %p264 = scmp.ne.s32.totalorder %s252, %s253
    %p265 = scmp.eq.s32.totalorder %s23, 1
    %p266 = por %p264, %p265
    %p268 = scmp.ne.s32.totalorder %s253, %s267
    %p269 = scmp.eq.s32.totalorder %s23, 0
    %p270 = por %p268, %p269
    %s271 = ssub.s32 %s17, %s24
    %p272 = scmp.eq.s32.totalorder %s271, 0
    %s274 = sadd.s32 %s273, 1
    %s275 = scalar_select %p272, %s273, %s274
    %p278 = pneg %p272
    %p279 = scmp.eq.s32.totalorder %s17, 1
    %p280 = por %p278, %p279
    %p281 = scmp.ne.s32.totalorder %s273, %s276
    %p282 = scmp.eq.s32.totalorder %s17, 0
    %p283 = por %p281, %p282
    %p284 = scmp.ne.s32.totalorder %s273, %s276
    %p285 = scmp.eq.s32.totalorder %s22, 1
    %p286 = por %p284, %p285
    %p287 = scmp.ne.s32.totalorder %s276, %s277
    %p288 = scmp.eq.s32.totalorder %s22, 0
    %p289 = por %p287, %p288
    %p290 = scmp.ne.s32.totalorder %s276, %s277
    %p291 = scmp.eq.s32.totalorder %s23, 1
    %p292 = por %p290, %p291
    %p294 = scmp.ne.s32.totalorder %s277, %s293
    %p295 = scmp.eq.s32.totalorder %s23, 0
    %p296 = por %p294, %p295
    %p297 = scmp.le.s32.totalorder 1, %s17
    %p298 = scmp.lt.s32.totalorder %s17, 3
    %p299 = pnand %p297, %p298
    %p300 = pneg %p299
    // Predicated region
    $region9: #{merge_c2f_t_c_forward.1} parent=5 // pred_check
      _
    $region10: #{merge_c2f_t_c_forward.1} parent=5 // pred_check_branch
      %302 = sbr.rel (%p299) target = $region12
    $region11: #{merge_c2f_t_c_forward.1} parent=5 // pred_region
      %s303 = ssub.s32 %s17, 1
      // Predicated region
      $region13: #{merge_c2f_t_c_forward.1} parent=11 // pred_check
        %p304 = pneg %p116
      $region14: #{merge_c2f_t_c_forward.1} parent=11 // pred_check_branch
        %306 = sbr.rel (%p304) target = $region16
      $region15: #{merge_c2f_t_c_forward.1} parent=11 // pred_region
        _
      $region16: #{merge_c2f_t_c_forward.1} parent=11 // pred_fallthru
        _
      // Predicated region
      $region17: #{merge_c2f_t_c_forward.1} parent=11 // pred_check
        %p307 = pneg %p137
      $region18: #{merge_c2f_t_c_forward.1} parent=11 // pred_check_branch
        %309 = sbr.rel (%p307) target = $region20
      $region19: #{merge_c2f_t_c_forward.1} parent=11 // pred_region
        _
      $region20: #{merge_c2f_t_c_forward.1} parent=11 // pred_fallthru
        _
      // Predicated region
      $region21: #{merge_c2f_t_c_forward.1} parent=11 // pred_check
        %p310 = pneg %p158
      $region22: #{merge_c2f_t_c_forward.1} parent=11 // pred_check_branch
        %312 = sbr.rel (%p310) target = $region24
      $region23: #{merge_c2f_t_c_forward.1} parent=11 // pred_region
        _
      $region24: #{merge_c2f_t_c_forward.1} parent=11 // pred_fallthru
        _
      // Predicated region
      $region25: #{merge_c2f_t_c_forward.1} parent=11 // pred_check
        %p313 = pneg %p179
      $region26: #{merge_c2f_t_c_forward.1} parent=11 // pred_check_branch
        %315 = sbr.rel (%p313) target = $region28
      $region27: #{merge_c2f_t_c_forward.1} parent=11 // pred_region
        _
      $region28: #{merge_c2f_t_c_forward.1} parent=11 // pred_fallthru
        _
      // Predicated region
      $region29: #{merge_c2f_t_c_forward.1} parent=11 // pred_check
        %p316 = pneg %p200
      $region30: #{merge_c2f_t_c_forward.1} parent=11 // pred_check_branch
        %318 = sbr.rel (%p316) target = $region32
      $region31: #{merge_c2f_t_c_forward.1} parent=11 // pred_region
        _
      $region32: #{merge_c2f_t_c_forward.1} parent=11 // pred_fallthru
        _
      // Predicated region
      $region33: #{merge_c2f_t_c_forward.1} parent=11 // pred_check
        %p319 = pneg %p221
      $region34: #{merge_c2f_t_c_forward.1} parent=11 // pred_check_branch
        %321 = sbr.rel (%p319) target = $region36
      $region35: #{merge_c2f_t_c_forward.1} parent=11 // pred_region
        _
      $region36: #{merge_c2f_t_c_forward.1} parent=11 // pred_fallthru
        _
      // Predicated region
      $region37: #{merge_c2f_t_c_forward.1} parent=11 // pred_check
        %p322 = pneg %p242
      $region38: #{merge_c2f_t_c_forward.1} parent=11 // pred_check_branch
        %324 = sbr.rel (%p322) target = $region40
      $region39: #{merge_c2f_t_c_forward.1} parent=11 // pred_region
        _
      $region40: #{merge_c2f_t_c_forward.1} parent=11 // pred_fallthru
        _
      // Predicated region
      $region41: #{merge_c2f_t_c_forward.1} parent=11 // pred_check
        %p325 = pneg %p263
      $region42: #{merge_c2f_t_c_forward.1} parent=11 // pred_check_branch
        %327 = sbr.rel (%p325) target = $region44
      $region43: #{merge_c2f_t_c_forward.1} parent=11 // pred_region
        _
      $region44: #{merge_c2f_t_c_forward.1} parent=11 // pred_fallthru
        _
    $region12: #{merge_c2f_t_c_forward.1} parent=5 // pred_fallthru
      _
    %p328 = scmp.lt.s32.totalorder %s17, 2
    // Predicated region
    $region45: #{merge_c2f_t_c_forward.1} parent=5 // pred_check
      %p329 = pneg %p328
    $region46: #{merge_c2f_t_c_forward.1} parent=5 // pred_check_branch
      %331 = sbr.rel (%p329) target = $region48
    $region47: #{merge_c2f_t_c_forward.1} parent=5 // pred_region
      // Predicated region
      $region49: #{merge_c2f_t_c_forward.1} parent=47 // pred_check
        %p332 = pneg %p37
      $region50: #{merge_c2f_t_c_forward.1} parent=47 // pred_check_branch
        %334 = sbr.rel (%p332) target = $region52
      $region51: #{merge_c2f_t_c_forward.1} parent=47 // pred_region
        %p335 = scmp.lt.s32.totalorder %s17, 1
        %s336 = scalar_select %p335, %s17, 1
        %s337 = smul.addr %s336, 4
        %s338 = smul.addr %s337, 4
        %s339 = scalar_lea.vmem %s0, %s338
      $region52: #{merge_c2f_t_c_forward.1} parent=47 // pred_fallthru
        _
      // Predicated region
      $region53: #{merge_c2f_t_c_forward.1} parent=47 // pred_check
        %p340 = pneg %p63
      $region54: #{merge_c2f_t_c_forward.1} parent=47 // pred_check_branch
        %342 = sbr.rel (%p340) target = $region56
      $region55: #{merge_c2f_t_c_forward.1} parent=47 // pred_region
        %p343 = scmp.lt.s32.totalorder %s17, 1
        %s344 = scalar_select %p343, %s17, 1
        %s345 = smul.addr %s344, 2
        %s346 = smul.addr %s345, 4
        %s347 = scalar_lea.vmem %s1, %s346
      $region56: #{merge_c2f_t_c_forward.1} parent=47 // pred_fallthru
        _
      // Predicated region
      $region57: #{merge_c2f_t_c_forward.1} parent=47 // pred_check
        %p348 = pneg %p89
      $region58: #{merge_c2f_t_c_forward.1} parent=47 // pred_check_branch
        %350 = sbr.rel (%p348) target = $region60
      $region59: #{merge_c2f_t_c_forward.1} parent=47 // pred_region
        %p351 = scmp.lt.s32.totalorder %s17, 1
        %s352 = scalar_select %p351, %s17, 1
        %s353 = smul.addr %s352, 2
        %s354 = scalar_lea.vmem %s2, %s353
      $region60: #{merge_c2f_t_c_forward.1} parent=47 // pred_fallthru
        _
    $region48: #{merge_c2f_t_c_forward.1} parent=5 // pred_fallthru
      _
    %p355 = scmp.le.s32.totalorder 1, %s17
    %p356 = scmp.lt.s32.totalorder %s17, 3
    %p357 = pnand %p355, %p356
    %p358 = pneg %p357
    // Predicated region
    $region61: #{merge_c2f_t_c_forward.1} parent=5 // pred_check
      _
    $region62: #{merge_c2f_t_c_forward.1} parent=5 // pred_check_branch
      %360 = sbr.rel (%p357) target = $region64
    $region63: #{merge_c2f_t_c_forward.1} parent=5 // pred_region
      %s361 = ssub.s32 %s17, 1
      %p362 = scmp.lt.s32.totalorder %s22, 1
      %s363 = scalar_select %p362, %s22, 1
      %s364 = smul.addr %s363, 4
      %s365 = smul.addr %s364, 4
      %s366 = scalar_lea.vmem %s0, %s365
      %p367 = pneg %p43
      %p368 = pneg %p40
      %p369 = scmp.lt.s32.totalorder %s22, 1
      %s370 = scalar_select %p369, %s22, 1
      %s371 = smul.addr %s370, 2
      %s372 = smul.addr %s371, 4
      %s373 = scalar_lea.vmem %s1, %s372
      %p374 = pneg %p69
      %p375 = pneg %p66
      %p376 = scmp.lt.s32.totalorder %s22, 1
      %s377 = scalar_select %p376, %s22, 1
      %s378 = smul.addr %s377, 2
      %s379 = scalar_lea.vmem %s2, %s378
      %p380 = pneg %p95
      %p381 = pneg %p92
      %p382 = pneg %p116
      %p383 = pneg %p113
      %p384 = pneg %p137
      %p385 = pneg %p134
      %p386 = pneg %p158
      %p387 = pneg %p155
      %p388 = pneg %p179
      %p389 = pneg %p176
      %p390 = pneg %p200
      %p391 = pneg %p197
      %p392 = pneg %p221
      %p393 = pneg %p218
      %p394 = pneg %p242
      %p395 = pneg %p239
      %p396 = pneg %p263
      %p397 = pneg %p260
      %p398 = pneg %p289
      %p399 = pneg %p286
      %p400 = scmp.lt.s32.totalorder %s22, 1
      %s401 = scalar_select %p400, %s22, 1
      %s402 = smul.addr %s401, 2
      %s403 = smul.addr %s402, 8
      %s404 = scalar_lea.vmem %s11, %s403
      %p405 = scmp.lt.s32.totalorder %s22, 1
      %s406 = scalar_select %p405, %s22, 1
      %s407 = smul.addr %s406, 4
      %s408 = smul.addr %s407, 4
      %s409 = scalar_lea.vmem %s0, %s408
      %p410 = scmp.lt.s32.totalorder %s22, 1
      %s411 = scalar_select %p410, %s22, 1
      %s412 = smul.addr %s411, 2
      %s413 = smul.addr %s412, 4
      %s414 = scalar_lea.vmem %s1, %s413
      %p415 = scmp.lt.s32.totalorder %s22, 1
      %s416 = scalar_select %p415, %s22, 1
      %s417 = smul.addr %s416, 2
      %s418 = scalar_lea.vmem %s2, %s417
      %p419 = scmp.lt.s32.totalorder %s22, 1
      %s420 = scalar_select %p419, %s22, 1
      %s421 = smul.addr %s420, 2
      %s422 = smul.addr %s421, 8
      %s423 = scalar_lea.vmem %s11, %s422
      %v425 = vld [vmem:[%s3] sm:$0xf]
      %v426 = vld [vmem:[%s409] sm:$0xff]
      %v427 = vld [vmem:[%s409 + $0x8] sm:$0xff]
      %v428 = vld [vmem:[%s4] sm:$0xff]
      %430 = vset.pattern.permute.xlu0 0
      %431 = vperm.xlu0 %430, %v428
      %v432 = vpop.permute.xlu0 %431
      %v436 = vunpack.c.l.b16 %v426
      %v437 = vunpack.c.h.b16 %v426
      %v438 = vunpack.c.l.b16 %v427
      %v439 = vunpack.c.h.b16 %v427
      %v440 = vpack.c.b16 %v438, %v436
      %v441 = vpack.c.b16 %v439, %v437
      %vm444 = vcmask 130048
      %v446 = vsel %vm444, %v425, 0
      %448 = vmatprep.subr.bf16.mxu0 %v441
      %449 = vmatpush1.bf16.msra.mxu0 %v440
      %450 = vmatprep.subr.bf16.mxu0 0
      %451 = vmatpush1.bf16.msra.mxu0 0
      %452 = vmatprep.subr.bf16.mxu0 0
      %453 = vmatpush1.bf16.msra.mxu0 0
      %454 = vmatprep.subr.bf16.mxu0 0
      %455 = vmatpush1.bf16.msra.mxu0 0
      %456 = vmatprep.subr.bf16.mxu0 0
      %457 = vmatpush1.bf16.msra.mxu0 0
      %458 = vmatprep.subr.bf16.mxu0 0
      %459 = vmatpush1.bf16.msra.mxu0 0
      %460 = vmatprep.subr.bf16.mxu0 0
      %461 = vmatpush1.bf16.msra.mxu0 0
      %462 = vmatprep.subr.bf16.mxu0 0
      %463 = vmatpush1.bf16.msra.mxu0 0
      %464 = vmatprep.subr.bf16.mxu0 0
      %465 = vmatpush1.bf16.msra.mxu0 0
      %466 = vmatprep.subr.bf16.mxu0 0
      %467 = vmatpush1.bf16.msra.mxu0 0
      %468 = vmatprep.subr.bf16.mxu0 0
      %469 = vmatpush1.bf16.msra.mxu0 0
      %470 = vmatprep.subr.bf16.mxu0 0
      %471 = vmatpush1.bf16.msra.mxu0 0
      %472 = vmatprep.subr.bf16.mxu0 0
      %473 = vmatpush1.bf16.msra.mxu0 0
      %474 = vmatprep.subr.bf16.mxu0 0
      %475 = vmatpush1.bf16.msra.mxu0 0
      %476 = vmatprep.subr.bf16.mxu0 0
      %477 = vmatpush1.bf16.msra.mxu0 0
      %478 = vmatprep.subr.bf16.mxu0 0
      %479 = vmatpush1.bf16.msra.mxu0 0
      %480 = vmatprep.mubr.bf16.mxu0 0
      %481 = vmatmul.mubr.bf16.gmra.mrb[0].mxu0 %v446
      %v482 = vpop.f32.mrb[0].mxu0
      %v483 = vadd.f32 %v432, %v482
      %v484 = vpop.f32.mrb[0].mxu0
      %v485 = vadd.f32 %v432, %v484
      %v486 = vpop.f32.mrb[0].mxu0
      %v487 = vpop.f32.mrb[0].mxu0
      %488 = vdwg.mxu0
      %v489 = vld [vmem:[%s5] sm:$0xf]
      %v490 = vld [vmem:[%s5 + $0x4] sm:$0xf]
      %v491 = vld [vmem:[%s5 + $0x8] sm:$0xf]
      %v492 = vld [vmem:[%s5 + $0xc] sm:$0xf]
      %v493 = vld [vmem:[%s418] sm:$0x3]
      %v498 = vunpack.c.l.b16 %v489
      %v499 = vunpack.c.l.b16 %v490
      %v500 = vunpack.c.l.b16 %v491
      %v501 = vunpack.c.l.b16 %v492
      %v502 = vpack.c.b16 %v499, %v498
      %v503 = vpack.c.b16 %v501, %v500
      %vm504 = vcmask 31744
      %v506 = vsel %vm504, %v502, 0
      %v509 = vsel %vm504, %v503, 0
      %vm511 = vcmask 1041408
      %v513 = vsel %vm511, %v493, 0
      %515 = vmatprep.subr.bf16.mxu0 0
      %516 = vmatpush1.bf16.msra.mxu0 %v513
      %517 = vmatprep.subr.bf16.mxu0 0
      %518 = vmatpush1.bf16.msra.mxu0 0
      %519 = vmatprep.subr.bf16.mxu0 0
      %520 = vmatpush1.bf16.msra.mxu0 0
      %521 = vmatprep.subr.bf16.mxu0 0
      %522 = vmatpush1.bf16.msra.mxu0 0
      %523 = vmatprep.subr.bf16.mxu0 0
      %524 = vmatpush1.bf16.msra.mxu0 0
      %525 = vmatprep.subr.bf16.mxu0 0
      %526 = vmatpush1.bf16.msra.mxu0 0
      %527 = vmatprep.subr.bf16.mxu0 0
      %528 = vmatpush1.bf16.msra.mxu0 0
      %529 = vmatprep.subr.bf16.mxu0 0
      %530 = vmatpush1.bf16.msra.mxu0 0
      %531 = vmatprep.subr.bf16.mxu0 0
      %532 = vmatpush1.bf16.msra.mxu0 0
      %533 = vmatprep.subr.bf16.mxu0 0
      %534 = vmatpush1.bf16.msra.mxu0 0
      %535 = vmatprep.subr.bf16.mxu0 0
      %536 = vmatpush1.bf16.msra.mxu0 0
      %537 = vmatprep.subr.bf16.mxu0 0
      %538 = vmatpush1.bf16.msra.mxu0 0
      %539 = vmatprep.subr.bf16.mxu0 0
      %540 = vmatpush1.bf16.msra.mxu0 0
      %541 = vmatprep.subr.bf16.mxu0 0
      %542 = vmatpush1.bf16.msra.mxu0 0
      %543 = vmatprep.subr.bf16.mxu0 0
      %544 = vmatpush1.bf16.msra.mxu0 0
      %545 = vmatprep.subr.bf16.mxu0 0
      %546 = vmatpush1.bf16.msra.mxu0 0
      %547 = vmatprep.mubr.bf16.mxu0 0
      %548 = vmatmul.mubr.bf16.gmra.mrb[0].mxu0 %v506
      %v549 = vpop.f32.mrb[0].mxu0
      %v550 = vadd.f32 0.0, %v549
      %v551 = vpop.f32.mrb[0].mxu0
      %v552 = vpop.f32.mrb[0].mxu0
      %v553 = vadd.f32 0.0, %v552
      %v554 = vpop.f32.mrb[0].mxu0
      %555 = vmatprep.mubr.bf16.mxu0 0
      %556 = vmatmul.mubr.bf16.gmra.mrb[0].mxu0 %v509
      %v557 = vpop.f32.mrb[0].mxu0
      %v558 = vadd.f32 0.0, %v557
      %v559 = vpop.f32.mrb[0].mxu0
      %v560 = vpop.f32.mrb[0].mxu0
      %v561 = vadd.f32 0.0, %v560
      %v562 = vpop.f32.mrb[0].mxu0
      %563 = vdwg.mxu0
      %v564 = vpack.c.bf16 %v550, %v550
      %v565 = vld [vmem:[%s9] sm:$0xff]
      %v566 = vld [vmem:[%s9 + $0x8] sm:$0xff]
      %v567 = vld [vmem:[%s9 + $0x10] sm:$0xff]
      %v568 = vld [vmem:[%s9 + $0x18] sm:$0xff]
      %v569 = vld [vmem:[%s9 + $0x20] sm:$0xff]
      %v570 = vld [vmem:[%s9 + $0x28] sm:$0xff]
      %v571 = vld [vmem:[%s9 + $0x30] sm:$0xff]
      %v572 = vld [vmem:[%s9 + $0x38] sm:$0xff]
      %v573 = vpack.c.bf16 %v553, %v553
      %s574 = scalar_lea.vmem %s9, 64
      %v575 = vld [vmem:[%s574] sm:$0xff]
      %v576 = vld [vmem:[%s574 + $0x8] sm:$0xff]
      %v577 = vld [vmem:[%s574 + $0x10] sm:$0xff]
      %v578 = vld [vmem:[%s574 + $0x18] sm:$0xff]
      %v579 = vld [vmem:[%s574 + $0x20] sm:$0xff]
      %v580 = vld [vmem:[%s574 + $0x28] sm:$0xff]
      %v581 = vld [vmem:[%s574 + $0x30] sm:$0xff]
      %v582 = vld [vmem:[%s574 + $0x38] sm:$0xff]
      %v591 = vunpack.c.l.b16 %v575
      %v592 = vunpack.c.h.b16 %v575
      %v593 = vunpack.c.l.b16 %v576
      %v594 = vunpack.c.h.b16 %v576
      %v595 = vunpack.c.l.b16 %v577
      %v596 = vunpack.c.h.b16 %v577
      %v597 = vunpack.c.l.b16 %v578
      %v598 = vunpack.c.h.b16 %v578
      %v599 = vunpack.c.l.b16 %v579
      %v600 = vunpack.c.h.b16 %v579
      %v601 = vunpack.c.l.b16 %v580
      %v602 = vunpack.c.h.b16 %v580
      %v603 = vunpack.c.l.b16 %v581
      %v604 = vunpack.c.h.b16 %v581
      %v605 = vunpack.c.l.b16 %v582
      %v606 = vunpack.c.h.b16 %v582
      %v607 = vpack.c.b16 %v593, %v591
      %v608 = vpack.c.b16 %v594, %v592
      %v609 = vpack.c.b16 %v597, %v595
      %v610 = vpack.c.b16 %v598, %v596
      %v611 = vpack.c.b16 %v601, %v599
      %v612 = vpack.c.b16 %v602, %v600
      %v613 = vpack.c.b16 %v605, %v603
      %v614 = vpack.c.b16 %v606, %v604
      %vm623 = vcmask 523264
      %v625 = vsel %vm623, %v573, 0
      %627 = vmatprep.subr.bf16.mxu0 %v608
      %628 = vmatpush1.bf16.msra.mxu0 %v607
      %629 = vmatprep.subr.bf16.mxu0 %v610
      %630 = vmatpush1.bf16.msra.mxu0 %v609
      %631 = vmatprep.subr.bf16.mxu0 %v612
      %632 = vmatpush1.bf16.msra.mxu0 %v611
      %633 = vmatprep.subr.bf16.mxu0 %v614
      %634 = vmatpush1.bf16.msra.mxu0 %v613
      %635 = vmatprep.subr.bf16.mxu0 0
      %636 = vmatpush1.bf16.msra.mxu0 0
      %637 = vmatprep.subr.bf16.mxu0 0
      %638 = vmatpush1.bf16.msra.mxu0 0
      %639 = vmatprep.subr.bf16.mxu0 0
      %640 = vmatpush1.bf16.msra.mxu0 0
      %641 = vmatprep.subr.bf16.mxu0 0
      %642 = vmatpush1.bf16.msra.mxu0 0
      %643 = vmatprep.subr.bf16.mxu0 0
      %644 = vmatpush1.bf16.msra.mxu0 0
      %645 = vmatprep.subr.bf16.mxu0 0
      %646 = vmatpush1.bf16.msra.mxu0 0
      %647 = vmatprep.subr.bf16.mxu0 0
      %648 = vmatpush1.bf16.msra.mxu0 0
      %649 = vmatprep.subr.bf16.mxu0 0
      %650 = vmatpush1.bf16.msra.mxu0 0
      %651 = vmatprep.subr.bf16.mxu0 0
      %652 = vmatpush1.bf16.msra.mxu0 0
      %653 = vmatprep.subr.bf16.mxu0 0
      %654 = vmatpush1.bf16.msra.mxu0 0
      %655 = vmatprep.subr.bf16.mxu0 0
      %656 = vmatpush1.bf16.msra.mxu0 0
      %657 = vmatprep.subr.bf16.mxu0 0
      %658 = vmatpush1.bf16.msra.mxu0 0
      %659 = vmatprep.mubr.bf16.mxu0 0
      %660 = vmatmul.mubr.bf16.gmra.mrb[0].mxu0 %v625
      %v661 = vpop.f32.mrb[0].mxu0
      %v662 = vadd.f32 0.0, %v661
      %v663 = vpop.f32.mrb[0].mxu0
      %v664 = vadd.f32 0.0, %v663
      %v665 = vpop.f32.mrb[0].mxu0
      %v666 = vpop.f32.mrb[0].mxu0
      %667 = vdwg.mxu0
      %v676 = vunpack.c.l.b16 %v565
      %v677 = vunpack.c.h.b16 %v565
      %v678 = vunpack.c.l.b16 %v566
      %v679 = vunpack.c.h.b16 %v566
      %v680 = vunpack.c.l.b16 %v567
      %v681 = vunpack.c.h.b16 %v567
      %v682 = vunpack.c.l.b16 %v568
      %v683 = vunpack.c.h.b16 %v568
      %v684 = vunpack.c.l.b16 %v569
      %v685 = vunpack.c.h.b16 %v569
      %v686 = vunpack.c.l.b16 %v570
      %v687 = vunpack.c.h.b16 %v570
      %v688 = vunpack.c.l.b16 %v571
      %v689 = vunpack.c.h.b16 %v571
      %v690 = vunpack.c.l.b16 %v572
      %v691 = vunpack.c.h.b16 %v572
      %v692 = vpack.c.b16 %v678, %v676
      %v693 = vpack.c.b16 %v679, %v677
      %v694 = vpack.c.b16 %v682, %v680
      %v695 = vpack.c.b16 %v683, %v681
      %v696 = vpack.c.b16 %v686, %v684
      %v697 = vpack.c.b16 %v687, %v685
      %v698 = vpack.c.b16 %v690, %v688
      %v699 = vpack.c.b16 %v691, %v689
      %v709 = vsel %vm623, %v564, 0
      %711 = vmatprep.subr.bf16.mxu0 %v693
      %712 = vmatpush1.bf16.msra.mxu0 %v692
      %713 = vmatprep.subr.bf16.mxu0 %v695
      %714 = vmatpush1.bf16.msra.mxu0 %v694
      %715 = vmatprep.subr.bf16.mxu0 %v697
      %716 = vmatpush1.bf16.msra.mxu0 %v696
      %717 = vmatprep.subr.bf16.mxu0 %v699
      %718 = vmatpush1.bf16.msra.mxu0 %v698
      %719 = vmatprep.subr.bf16.mxu0 0
      %720 = vmatpush1.bf16.msra.mxu0 0
      %721 = vmatprep.subr.bf16.mxu0 0
      %722 = vmatpush1.bf16.msra.mxu0 0
      %723 = vmatprep.subr.bf16.mxu0 0
      %724 = vmatpush1.bf16.msra.mxu0 0
      %725 = vmatprep.subr.bf16.mxu0 0
      %726 = vmatpush1.bf16.msra.mxu0 0
      %727 = vmatprep.subr.bf16.mxu0 0
      %728 = vmatpush1.bf16.msra.mxu0 0
      %729 = vmatprep.subr.bf16.mxu0 0
      %730 = vmatpush1.bf16.msra.mxu0 0
      %731 = vmatprep.subr.bf16.mxu0 0
      %732 = vmatpush1.bf16.msra.mxu0 0
      %733 = vmatprep.subr.bf16.mxu0 0
      %734 = vmatpush1.bf16.msra.mxu0 0
      %735 = vmatprep.subr.bf16.mxu0 0
      %736 = vmatpush1.bf16.msra.mxu0 0
      %737 = vmatprep.subr.bf16.mxu0 0
      %738 = vmatpush1.bf16.msra.mxu0 0
      %739 = vmatprep.subr.bf16.mxu0 0
      %740 = vmatpush1.bf16.msra.mxu0 0
      %741 = vmatprep.subr.bf16.mxu0 0
      %742 = vmatpush1.bf16.msra.mxu0 0
      %743 = vmatprep.mubr.bf16.mxu0 0
      %744 = vmatmul.mubr.bf16.gmra.mrb[0].mxu0 %v709
      %v745 = vpop.f32.mrb[0].mxu0
      %v746 = vadd.f32 %v662, %v745
      %v747 = vpop.f32.mrb[0].mxu0
      %v748 = vadd.f32 %v664, %v747
      %v749 = vpop.f32.mrb[0].mxu0
      %v750 = vpop.f32.mrb[0].mxu0
      %751 = vdwg.mxu0
      %v752 = vpack.c.bf16 %v558, %v558
      %s753 = scalar_lea.vmem %s9, 128
      %v754 = vld [vmem:[%s753] sm:$0xff]
      %v755 = vld [vmem:[%s753 + $0x8] sm:$0xff]
      %v756 = vld [vmem:[%s753 + $0x10] sm:$0xff]
      %v757 = vld [vmem:[%s753 + $0x18] sm:$0xff]
      %v758 = vld [vmem:[%s753 + $0x20] sm:$0xff]
      %v759 = vld [vmem:[%s753 + $0x28] sm:$0xff]
      %v760 = vld [vmem:[%s753 + $0x30] sm:$0xff]
      %v761 = vld [vmem:[%s753 + $0x38] sm:$0xff]
      %v770 = vunpack.c.l.b16 %v754
      %v771 = vunpack.c.h.b16 %v754
      %v772 = vunpack.c.l.b16 %v755
      %v773 = vunpack.c.h.b16 %v755
      %v774 = vunpack.c.l.b16 %v756
      %v775 = vunpack.c.h.b16 %v756
      %v776 = vunpack.c.l.b16 %v757
      %v777 = vunpack.c.h.b16 %v757
      %v778 = vunpack.c.l.b16 %v758
      %v779 = vunpack.c.h.b16 %v758
      %v780 = vunpack.c.l.b16 %v759
      %v781 = vunpack.c.h.b16 %v759
      %v782 = vunpack.c.l.b16 %v760
      %v783 = vunpack.c.h.b16 %v760
      %v784 = vunpack.c.l.b16 %v761
      %v785 = vunpack.c.h.b16 %v761
      %v786 = vpack.c.b16 %v772, %v770
      %v787 = vpack.c.b16 %v773, %v771
      %v788 = vpack.c.b16 %v776, %v774
      %v789 = vpack.c.b16 %v777, %v775
      %v790 = vpack.c.b16 %v780, %v778
      %v791 = vpack.c.b16 %v781, %v779
      %v792 = vpack.c.b16 %v784, %v782
      %v793 = vpack.c.b16 %v785, %v783
      %v803 = vsel %vm623, %v752, 0
      %805 = vmatprep.subr.bf16.mxu0 %v787
      %806 = vmatpush1.bf16.msra.mxu0 %v786
      %807 = vmatprep.subr.bf16.mxu0 %v789
      %808 = vmatpush1.bf16.msra.mxu0 %v788
      %809 = vmatprep.subr.bf16.mxu0 %v791
      %810 = vmatpush1.bf16.msra.mxu0 %v790
      %811 = vmatprep.subr.bf16.mxu0 %v793
      %812 = vmatpush1.bf16.msra.mxu0 %v792
      %813 = vmatprep.subr.bf16.mxu0 0
      %814 = vmatpush1.bf16.msra.mxu0 0
      %815 = vmatprep.subr.bf16.mxu0 0
      %816 = vmatpush1.bf16.msra.mxu0 0
      %817 = vmatprep.subr.bf16.mxu0 0
      %818 = vmatpush1.bf16.msra.mxu0 0
      %819 = vmatprep.subr.bf16.mxu0 0
      %820 = vmatpush1.bf16.msra.mxu0 0
      %821 = vmatprep.subr.bf16.mxu0 0
      %822 = vmatpush1.bf16.msra.mxu0 0
      %823 = vmatprep.subr.bf16.mxu0 0
      %824 = vmatpush1.bf16.msra.mxu0 0
      %825 = vmatprep.subr.bf16.mxu0 0
      %826 = vmatpush1.bf16.msra.mxu0 0
      %827 = vmatprep.subr.bf16.mxu0 0
      %828 = vmatpush1.bf16.msra.mxu0 0
      %829 = vmatprep.subr.bf16.mxu0 0
      %830 = vmatpush1.bf16.msra.mxu0 0
      %831 = vmatprep.subr.bf16.mxu0 0
      %832 = vmatpush1.bf16.msra.mxu0 0
      %833 = vmatprep.subr.bf16.mxu0 0
      %834 = vmatpush1.bf16.msra.mxu0 0
      %835 = vmatprep.subr.bf16.mxu0 0
      %836 = vmatpush1.bf16.msra.mxu0 0
      %837 = vmatprep.mubr.bf16.mxu0 0
      %838 = vmatmul.mubr.bf16.gmra.mrb[0].mxu0 %v803
      %v839 = vpop.f32.mrb[0].mxu0
      %v840 = vadd.f32 0.0, %v839
      %v841 = vpop.f32.mrb[0].mxu0
      %v842 = vadd.f32 0.0, %v841
      %v843 = vpop.f32.mrb[0].mxu0
      %v844 = vpop.f32.mrb[0].mxu0
      %845 = vdwg.mxu0
      %v846 = vadd.f32 %v746, %v840
      %v847 = vadd.f32 %v748, %v842
      %v848 = vpack.c.bf16 %v561, %v561
      %s849 = scalar_lea.vmem %s9, 192
      %v850 = vld [vmem:[%s849] sm:$0xff]
      %v851 = vld [vmem:[%s849 + $0x8] sm:$0xff]
      %v852 = vld [vmem:[%s849 + $0x10] sm:$0xff]
      %v853 = vld [vmem:[%s849 + $0x18] sm:$0xff]
      %v854 = vld [vmem:[%s849 + $0x20] sm:$0xff]
      %v855 = vld [vmem:[%s849 + $0x28] sm:$0xff]
      %v856 = vld [vmem:[%s849 + $0x30] sm:$0xff]
      %v857 = vld [vmem:[%s849 + $0x38] sm:$0xff]
      %v866 = vunpack.c.l.b16 %v850
      %v867 = vunpack.c.h.b16 %v850
      %v868 = vunpack.c.l.b16 %v851
      %v869 = vunpack.c.h.b16 %v851
      %v870 = vunpack.c.l.b16 %v852
      %v871 = vunpack.c.h.b16 %v852
      %v872 = vunpack.c.l.b16 %v853
      %v873 = vunpack.c.h.b16 %v853
      %v874 = vunpack.c.l.b16 %v854
      %v875 = vunpack.c.h.b16 %v854
      %v876 = vunpack.c.l.b16 %v855
      %v877 = vunpack.c.h.b16 %v855
      %v878 = vunpack.c.l.b16 %v856
      %v879 = vunpack.c.h.b16 %v856
      %v880 = vunpack.c.l.b16 %v857
      %v881 = vunpack.c.h.b16 %v857
      %v882 = vpack.c.b16 %v868, %v866
      %v883 = vpack.c.b16 %v869, %v867
      %v884 = vpack.c.b16 %v872, %v870
      %v885 = vpack.c.b16 %v873, %v871
      %v886 = vpack.c.b16 %v876, %v874
      %v887 = vpack.c.b16 %v877, %v875
      %v888 = vpack.c.b16 %v880, %v878
      %v889 = vpack.c.b16 %v881, %v879
      %v899 = vsel %vm623, %v848, 0
      %901 = vmatprep.subr.bf16.mxu0 %v883
      %902 = vmatpush1.bf16.msra.mxu0 %v882
      %903 = vmatprep.subr.bf16.mxu0 %v885
      %904 = vmatpush1.bf16.msra.mxu0 %v884
      %905 = vmatprep.subr.bf16.mxu0 %v887
      %906 = vmatpush1.bf16.msra.mxu0 %v886
      %907 = vmatprep.subr.bf16.mxu0 %v889
      %908 = vmatpush1.bf16.msra.mxu0 %v888
      %909 = vmatprep.subr.bf16.mxu0 0
      %910 = vmatpush1.bf16.msra.mxu0 0
      %911 = vmatprep.subr.bf16.mxu0 0
      %912 = vmatpush1.bf16.msra.mxu0 0
      %913 = vmatprep.subr.bf16.mxu0 0
      %914 = vmatpush1.bf16.msra.mxu0 0
      %915 = vmatprep.subr.bf16.mxu0 0
      %916 = vmatpush1.bf16.msra.mxu0 0
      %917 = vmatprep.subr.bf16.mxu0 0
      %918 = vmatpush1.bf16.msra.mxu0 0
      %919 = vmatprep.subr.bf16.mxu0 0
      %920 = vmatpush1.bf16.msra.mxu0 0
      %921 = vmatprep.subr.bf16.mxu0 0
      %922 = vmatpush1.bf16.msra.mxu0 0
      %923 = vmatprep.subr.bf16.mxu0 0
      %924 = vmatpush1.bf16.msra.mxu0 0
      %925 = vmatprep.subr.bf16.mxu0 0
      %926 = vmatpush1.bf16.msra.mxu0 0
      %927 = vmatprep.subr.bf16.mxu0 0
      %928 = vmatpush1.bf16.msra.mxu0 0
      %929 = vmatprep.subr.bf16.mxu0 0
      %930 = vmatpush1.bf16.msra.mxu0 0
      %931 = vmatprep.subr.bf16.mxu0 0
      %932 = vmatpush1.bf16.msra.mxu0 0
      %933 = vmatprep.mubr.bf16.mxu0 0
      %934 = vmatmul.mubr.bf16.gmra.mrb[0].mxu0 %v899
      %v935 = vpop.f32.mrb[0].mxu0
      %v936 = vadd.f32 0.0, %v935
      %v937 = vpop.f32.mrb[0].mxu0
      %v938 = vadd.f32 0.0, %v937
      %v939 = vpop.f32.mrb[0].mxu0
      %v940 = vpop.f32.mrb[0].mxu0
      %941 = vdwg.mxu0
      %v942 = vadd.f32 %v846, %v936
      %v943 = vadd.f32 %v847, %v938
      %v944 = vld [vmem:[%s6] sm:$0xff]
      %946 = vset.pattern.permute.xlu0 0
      %947 = vperm.xlu0 %946, %v944
      %v948 = vpop.permute.xlu0 %947
      %v950 = vadd.f32 %v942, %v948
      %v951 = vadd.f32 %v943, %v948
      %v952 = vld [vmem:[%s414] sm:$0xff]
      %v953 = vunpack.c.l.bf16 %v952
      %v954 = vunpack.c.h.bf16 %v952
      %955 = vrot.lane.b32.xlu0 %v483, 17
      %v956 = vpop.permute.xlu0 %955
      %957 = vrot.lane.b32.xlu0 %v953, 17
      %v958 = vpop.permute.xlu0 %957
      %959 = vrot.lane.b32.xlu0 %v950, 17
      %v960 = vpop.permute.xlu0 %959
      %961 = vrot.lane.b32.xlu0 0.0, 17
      %v962 = vpop.permute.xlu0 %961
      %963 = vrot.lane.b32.xlu0 %v485, 17
      %v964 = vpop.permute.xlu0 %963
      %965 = vrot.lane.b32.xlu0 %v954, 17
      %v966 = vpop.permute.xlu0 %965
      %967 = vrot.lane.b32.xlu0 %v951, 17
      %v968 = vpop.permute.xlu0 %967
      %v969 = vlaneseq
      %v970 = vand.u32 %v969, 127
      %vm971 = vcmp.lt.s32.totalorder %v970, 17
      %v972 = vsel %vm971, %v956, %v964
      %v973 = vsel %vm971, %v958, %v966
      %v974 = vsel %vm971, %v960, %v968
      %v975 = vsel %vm971, %v964, %v956
      %v976 = vsel %vm971, %v966, %v958
      %v977 = vsel %vm971, %v968, %v960
      %v978 = vld [vmem:[%s10] ss:$8 sm:$0x3]
      %v980 = vlaneseq
      %v981 = vshrl.u32 %v980, 7
      %v982 = vsub.s32 0, %v981
      %v983 = vrot.slane %v978, %v982
      %v984 = vlaneseq
      %v985 = vshrl.u32 %v984, 7
      %v986 = vsub.s32 1, %v985
      %v987 = vrot.slane %v978, %v986
      %v990 = vmul.f32 %v975, %v983
      %v991 = vmul.f32 %v972, %v987
      %v992 = vmul.f32 %v976, %v983
      %v993 = vmul.f32 %v973, %v987
      %v994 = vmul.f32 %v977, %v983
      %v995 = vmul.f32 %v974, %v987
      %v996 = vmul.f32 %v962, %v983
      %v997 = vmul.f32 %v962, %v987
      %v998 = vpack.c.bf16 %v992, %v990
      %v999 = vpack.c.bf16 %v993, %v991
      %v1000 = vpack.c.bf16 %v996, %v994
      %v1001 = vpack.c.bf16 %v997, %v995
      %1002 = vst [vmem:[#allocation2] sm:$0xff] %v998
      %1003 = vst [vmem:[#allocation2 + $0x8] sm:$0xff] %v999
      %1004 = vst [vmem:[#allocation2 + $0x10] sm:$0xff] %v1000
      %1005 = vst [vmem:[#allocation2 + $0x18] sm:$0xff] %v1001
      %1006 = vrot.lane.b32.xlu0 %v483, 16
      %v1007 = vpop.permute.xlu0 %1006
      %1008 = vrot.lane.b32.xlu0 %v953, 16
      %v1009 = vpop.permute.xlu0 %1008
      %1010 = vrot.lane.b32.xlu0 %v950, 16
      %v1011 = vpop.permute.xlu0 %1010
      %1012 = vrot.lane.b32.xlu0 0.0, 16
      %v1013 = vpop.permute.xlu0 %1012
      %1014 = vrot.lane.b32.xlu0 %v485, 16
      %v1015 = vpop.permute.xlu0 %1014
      %1016 = vrot.lane.b32.xlu0 %v954, 16
      %v1017 = vpop.permute.xlu0 %1016
      %1018 = vrot.lane.b32.xlu0 %v951, 16
      %v1019 = vpop.permute.xlu0 %1018
      %vm1020 = vcmp.lt.s32.totalorder %v970, 16
      %v1021 = vsel %vm1020, %v1007, %v1015
      %v1022 = vsel %vm1020, %v1009, %v1017
      %v1023 = vsel %vm1020, %v1011, %v1019
      %v1024 = vsel %vm1020, %v1015, %v1007
      %v1025 = vsel %vm1020, %v1017, %v1009
      %v1026 = vsel %vm1020, %v1019, %v1011
      %s1027 = scalar_lea.vmem %s10, 1
      %v1028 = vld [vmem:[%s1027] ss:$8 sm:$0x3]
      %v1030 = vlaneseq
      %v1031 = vshrl.u32 %v1030, 7
      %v1032 = vsub.s32 0, %v1031
      %v1033 = vrot.slane %v1028, %v1032
      %v1034 = vlaneseq
      %v1035 = vshrl.u32 %v1034, 7
      %v1036 = vsub.s32 1, %v1035
      %v1037 = vrot.slane %v1028, %v1036
      %v1040 = vmul.f32 %v1024, %v1033
      %v1041 = vmul.f32 %v1021, %v1037
      %v1042 = vmul.f32 %v1025, %v1033
      %v1043 = vmul.f32 %v1022, %v1037
      %v1044 = vmul.f32 %v1026, %v1033
      %v1045 = vmul.f32 %v1023, %v1037
      %v1046 = vmul.f32 %v1013, %v1033
      %v1047 = vmul.f32 %v1013, %v1037
      %v1048 = vpack.c.bf16 %v1042, %v1040
      %v1049 = vpack.c.bf16 %v1043, %v1041
      %v1050 = vpack.c.bf16 %v1046, %v1044
      %v1051 = vpack.c.bf16 %v1047, %v1045
      %1052 = vst [vmem:[#allocation2 + $0x20] sm:$0xff] %v1048
      %1053 = vst [vmem:[#allocation2 + $0x28] sm:$0xff] %v1049
      %1054 = vst [vmem:[#allocation2 + $0x30] sm:$0xff] %v1050
      %1055 = vst [vmem:[#allocation2 + $0x38] sm:$0xff] %v1051
      %1056 = vrot.lane.b32.xlu0 %v483, 15
      %v1057 = vpop.permute.xlu0 %1056
      %1058 = vrot.lane.b32.xlu0 %v953, 15
      %v1059 = vpop.permute.xlu0 %1058
      %1060 = vrot.lane.b32.xlu0 %v950, 15
      %v1061 = vpop.permute.xlu0 %1060
      %1062 = vrot.lane.b32.xlu0 0.0, 15
      %v1063 = vpop.permute.xlu0 %1062
      %1064 = vrot.lane.b32.xlu0 %v485, 15
      %v1065 = vpop.permute.xlu0 %1064
      %1066 = vrot.lane.b32.xlu0 %v954, 15
      %v1067 = vpop.permute.xlu0 %1066
      %1068 = vrot.lane.b32.xlu0 %v951, 15
      %v1069 = vpop.permute.xlu0 %1068
      %vm1070 = vcmp.lt.s32.totalorder %v970, 15
      %v1071 = vsel %vm1070, %v1057, %v1065
      %v1072 = vsel %vm1070, %v1059, %v1067
      %v1073 = vsel %vm1070, %v1061, %v1069
      %v1074 = vsel %vm1070, %v1065, %v1057
      %v1075 = vsel %vm1070, %v1067, %v1059
      %v1076 = vsel %vm1070, %v1069, %v1061
      %s1077 = scalar_lea.vmem %s10, 2
      %v1078 = vld [vmem:[%s1077] ss:$8 sm:$0x3]
      %v1080 = vlaneseq
      %v1081 = vshrl.u32 %v1080, 7
      %v1082 = vsub.s32 0, %v1081
      %v1083 = vrot.slane %v1078, %v1082
      %v1084 = vlaneseq
      %v1085 = vshrl.u32 %v1084, 7
      %v1086 = vsub.s32 1, %v1085
      %v1087 = vrot.slane %v1078, %v1086
      %v1090 = vmul.f32 %v1074, %v1083
      %v1091 = vmul.f32 %v1071, %v1087
      %v1092 = vmul.f32 %v1075, %v1083
      %v1093 = vmul.f32 %v1072, %v1087
      %v1094 = vmul.f32 %v1076, %v1083
      %v1095 = vmul.f32 %v1073, %v1087
      %v1096 = vmul.f32 %v1063, %v1083
      %v1097 = vmul.f32 %v1063, %v1087
      %v1098 = vpack.c.bf16 %v1092, %v1090
      %v1099 = vpack.c.bf16 %v1093, %v1091
      %v1100 = vpack.c.bf16 %v1096, %v1094
      %v1101 = vpack.c.bf16 %v1097, %v1095
      %1102 = vst [vmem:[#allocation2 + $0x40] sm:$0xff] %v1098
      %1103 = vst [vmem:[#allocation2 + $0x48] sm:$0xff] %v1099
      %1104 = vst [vmem:[#allocation2 + $0x50] sm:$0xff] %v1100
      %1105 = vst [vmem:[#allocation2 + $0x58] sm:$0xff] %v1101
      %1106 = vrot.lane.b32.xlu0 %v483, 1
      %v1107 = vpop.permute.xlu0 %1106
      %1108 = vrot.lane.b32.xlu0 %v953, 1
      %v1109 = vpop.permute.xlu0 %1108
      %1110 = vrot.lane.b32.xlu0 %v950, 1
      %v1111 = vpop.permute.xlu0 %1110
      %1112 = vrot.lane.b32.xlu0 0.0, 1
      %v1113 = vpop.permute.xlu0 %1112
      %1114 = vrot.lane.b32.xlu0 %v485, 1
      %v1115 = vpop.permute.xlu0 %1114
      %1116 = vrot.lane.b32.xlu0 %v954, 1
      %v1117 = vpop.permute.xlu0 %1116
      %1118 = vrot.lane.b32.xlu0 %v951, 1
      %v1119 = vpop.permute.xlu0 %1118
      %vm1120 = vcmp.lt.s32.totalorder %v970, 1
      %v1121 = vsel %vm1120, %v1107, %v1115
      %v1122 = vsel %vm1120, %v1109, %v1117
      %v1123 = vsel %vm1120, %v1111, %v1119
      %v1124 = vsel %vm1120, %v1115, %v1107
      %v1125 = vsel %vm1120, %v1117, %v1109
      %v1126 = vsel %vm1120, %v1119, %v1111
      %s1127 = scalar_lea.vmem %s10, 3
      %v1128 = vld [vmem:[%s1127] ss:$8 sm:$0x3]
      %v1130 = vlaneseq
      %v1131 = vshrl.u32 %v1130, 7
      %v1132 = vsub.s32 0, %v1131
      %v1133 = vrot.slane %v1128, %v1132
      %v1134 = vlaneseq
      %v1135 = vshrl.u32 %v1134, 7
      %v1136 = vsub.s32 1, %v1135
      %v1137 = vrot.slane %v1128, %v1136
      %v1140 = vmul.f32 %v1124, %v1133
      %v1141 = vmul.f32 %v1121, %v1137
      %v1142 = vmul.f32 %v1125, %v1133
      %v1143 = vmul.f32 %v1122, %v1137
      %v1144 = vmul.f32 %v1126, %v1133
      %v1145 = vmul.f32 %v1123, %v1137
      %v1146 = vmul.f32 %v1113, %v1133
      %v1147 = vmul.f32 %v1113, %v1137
      %v1148 = vpack.c.bf16 %v1142, %v1140
      %v1149 = vpack.c.bf16 %v1143, %v1141
      %v1150 = vpack.c.bf16 %v1146, %v1144
      %v1151 = vpack.c.bf16 %v1147, %v1145
      %1152 = vst [vmem:[#allocation2 + $0x60] sm:$0xff] %v1148
      %1153 = vst [vmem:[#allocation2 + $0x68] sm:$0xff] %v1149
      %1154 = vst [vmem:[#allocation2 + $0x70] sm:$0xff] %v1150
      %1155 = vst [vmem:[#allocation2 + $0x78] sm:$0xff] %v1151
      %v1156 = vpack.c.bf16 %v953, %v483
      %v1157 = vpack.c.bf16 %v954, %v485
      %v1158 = vpack.c.bf16 0.0, %v950
      %v1159 = vpack.c.bf16 0.0, %v951
      %1160 = vst [vmem:[#allocation2 + $0x80] sm:$0xff] %v1156
      %1161 = vst [vmem:[#allocation2 + $0x88] sm:$0xff] %v1157
      %1162 = vst [vmem:[#allocation2 + $0x90] sm:$0xff] %v1158
      %1163 = vst [vmem:[#allocation2 + $0x98] sm:$0xff] %v1159
      %1164 = vrot.lane.b32.xlu0 %v483, 127
      %v1165 = vpop.permute.xlu0 %1164
      %1166 = vrot.lane.b32.xlu0 %v953, 127
      %v1167 = vpop.permute.xlu0 %1166
      %1168 = vrot.lane.b32.xlu0 %v950, 127
      %v1169 = vpop.permute.xlu0 %1168
      %1170 = vrot.lane.b32.xlu0 0.0, 127
      %v1171 = vpop.permute.xlu0 %1170
      %1172 = vrot.lane.b32.xlu0 %v485, 127
      %v1173 = vpop.permute.xlu0 %1172
      %1174 = vrot.lane.b32.xlu0 %v954, 127
      %v1175 = vpop.permute.xlu0 %1174
      %1176 = vrot.lane.b32.xlu0 %v951, 127
      %v1177 = vpop.permute.xlu0 %1176
      %vm1178 = vcmp.lt.s32.totalorder %v970, 127
      %v1179 = vsel %vm1178, %v1165, %v1173
      %v1180 = vsel %vm1178, %v1167, %v1175
      %v1181 = vsel %vm1178, %v1169, %v1177
      %v1182 = vsel %vm1178, %v1173, %v1165
      %v1183 = vsel %vm1178, %v1175, %v1167
      %v1184 = vsel %vm1178, %v1177, %v1169
      %s1185 = scalar_lea.vmem %s10, 5
      %v1186 = vld [vmem:[%s1185] ss:$8 sm:$0x3]
      %v1188 = vlaneseq
      %v1189 = vshrl.u32 %v1188, 7
      %v1190 = vsub.s32 0, %v1189
      %v1191 = vrot.slane %v1186, %v1190
      %v1192 = vlaneseq
      %v1193 = vshrl.u32 %v1192, 7
      %v1194 = vsub.s32 1, %v1193
      %v1195 = vrot.slane %v1186, %v1194
      %v1198 = vmul.f32 %v1179, %v1191
      %v1199 = vmul.f32 %v1182, %v1195
      %v1200 = vmul.f32 %v1180, %v1191
      %v1201 = vmul.f32 %v1183, %v1195
      %v1202 = vmul.f32 %v1181, %v1191
      %v1203 = vmul.f32 %v1184, %v1195
      %v1204 = vmul.f32 %v1171, %v1191
      %v1205 = vmul.f32 %v1171, %v1195
      %v1206 = vpack.c.bf16 %v1200, %v1198
      %v1207 = vpack.c.bf16 %v1201, %v1199
      %v1208 = vpack.c.bf16 %v1204, %v1202
      %v1209 = vpack.c.bf16 %v1205, %v1203
      %1210 = vst [vmem:[#allocation2 + $0xa0] sm:$0xff] %v1206
      %1211 = vst [vmem:[#allocation2 + $0xa8] sm:$0xff] %v1207
      %1212 = vst [vmem:[#allocation2 + $0xb0] sm:$0xff] %v1208
      %1213 = vst [vmem:[#allocation2 + $0xb8] sm:$0xff] %v1209
      %1214 = vrot.lane.b32.xlu0 %v483, 113
      %v1215 = vpop.permute.xlu0 %1214
      %1216 = vrot.lane.b32.xlu0 %v953, 113
      %v1217 = vpop.permute.xlu0 %1216
      %1218 = vrot.lane.b32.xlu0 %v950, 113
      %v1219 = vpop.permute.xlu0 %1218
      %1220 = vrot.lane.b32.xlu0 0.0, 113
      %v1221 = vpop.permute.xlu0 %1220
      %1222 = vrot.lane.b32.xlu0 %v485, 113
      %v1223 = vpop.permute.xlu0 %1222
      %1224 = vrot.lane.b32.xlu0 %v954, 113
      %v1225 = vpop.permute.xlu0 %1224
      %1226 = vrot.lane.b32.xlu0 %v951, 113
      %v1227 = vpop.permute.xlu0 %1226
      %vm1228 = vcmp.lt.s32.totalorder %v970, 113
      %v1229 = vsel %vm1228, %v1215, %v1223
      %v1230 = vsel %vm1228, %v1217, %v1225
      %v1231 = vsel %vm1228, %v1219, %v1227
      %v1232 = vsel %vm1228, %v1223, %v1215
      %v1233 = vsel %vm1228, %v1225, %v1217
      %v1234 = vsel %vm1228, %v1227, %v1219
      %s1235 = scalar_lea.vmem %s10, 6
      %v1236 = vld [vmem:[%s1235] ss:$8 sm:$0x3]
      %v1238 = vlaneseq
      %v1239 = vshrl.u32 %v1238, 7
      %v1240 = vsub.s32 0, %v1239
      %v1241 = vrot.slane %v1236, %v1240
      %v1242 = vlaneseq
      %v1243 = vshrl.u32 %v1242, 7
      %v1244 = vsub.s32 1, %v1243
      %v1245 = vrot.slane %v1236, %v1244
      %v1248 = vmul.f32 %v1229, %v1241
      %v1249 = vmul.f32 %v1232, %v1245
      %v1250 = vmul.f32 %v1230, %v1241
      %v1251 = vmul.f32 %v1233, %v1245
      %v1252 = vmul.f32 %v1231, %v1241
      %v1253 = vmul.f32 %v1234, %v1245
      %v1254 = vmul.f32 %v1221, %v1241
      %v1255 = vmul.f32 %v1221, %v1245
      %v1256 = vpack.c.bf16 %v1250, %v1248
      %v1257 = vpack.c.bf16 %v1251, %v1249
      %v1258 = vpack.c.bf16 %v1254, %v1252
      %v1259 = vpack.c.bf16 %v1255, %v1253
      %1260 = vst [vmem:[#allocation2 + $0xc0] sm:$0xff] %v1256
      %1261 = vst [vmem:[#allocation2 + $0xc8] sm:$0xff] %v1257
      %1262 = vst [vmem:[#allocation2 + $0xd0] sm:$0xff] %v1258
      %1263 = vst [vmem:[#allocation2 + $0xd8] sm:$0xff] %v1259
      %1264 = vrot.lane.b32.xlu0 %v483, 112
      %v1265 = vpop.permute.xlu0 %1264
      %1266 = vrot.lane.b32.xlu0 %v953, 112
      %v1267 = vpop.permute.xlu0 %1266
      %1268 = vrot.lane.b32.xlu0 %v950, 112
      %v1269 = vpop.permute.xlu0 %1268
      %1270 = vrot.lane.b32.xlu0 0.0, 112
      %v1271 = vpop.permute.xlu0 %1270
      %1272 = vrot.lane.b32.xlu0 %v485, 112
      %v1273 = vpop.permute.xlu0 %1272
      %1274 = vrot.lane.b32.xlu0 %v954, 112
      %v1275 = vpop.permute.xlu0 %1274
      %1276 = vrot.lane.b32.xlu0 %v951, 112
      %v1277 = vpop.permute.xlu0 %1276
      %vm1278 = vcmp.lt.s32.totalorder %v970, 112
      %v1279 = vsel %vm1278, %v1265, %v1273
      %v1280 = vsel %vm1278, %v1267, %v1275
      %v1281 = vsel %vm1278, %v1269, %v1277
      %v1282 = vsel %vm1278, %v1273, %v1265
      %v1283 = vsel %vm1278, %v1275, %v1267
      %v1284 = vsel %vm1278, %v1277, %v1269
      %s1285 = scalar_lea.vmem %s10, 7
      %v1286 = vld [vmem:[%s1285] ss:$8 sm:$0x3]
      %v1288 = vlaneseq
      %v1289 = vshrl.u32 %v1288, 7
      %v1290 = vsub.s32 0, %v1289
      %v1291 = vrot.slane %v1286, %v1290
      %v1292 = vlaneseq
      %v1293 = vshrl.u32 %v1292, 7
      %v1294 = vsub.s32 1, %v1293
      %v1295 = vrot.slane %v1286, %v1294
      %v1298 = vmul.f32 %v1279, %v1291
      %v1299 = vmul.f32 %v1282, %v1295
      %v1300 = vmul.f32 %v1280, %v1291
      %v1301 = vmul.f32 %v1283, %v1295
      %v1302 = vmul.f32 %v1281, %v1291
      %v1303 = vmul.f32 %v1284, %v1295
      %v1304 = vmul.f32 %v1271, %v1291
      %v1305 = vmul.f32 %v1271, %v1295
      %v1306 = vpack.c.bf16 %v1300, %v1298
      %v1307 = vpack.c.bf16 %v1301, %v1299
      %v1308 = vpack.c.bf16 %v1304, %v1302
      %v1309 = vpack.c.bf16 %v1305, %v1303
      %1310 = vst [vmem:[#allocation2 + $0xe0] sm:$0xff] %v1306
      %1311 = vst [vmem:[#allocation2 + $0xe8] sm:$0xff] %v1307
      %1312 = vst [vmem:[#allocation2 + $0xf0] sm:$0xff] %v1308
      %1313 = vst [vmem:[#allocation2 + $0xf8] sm:$0xff] %v1309
      %1314 = vrot.lane.b32.xlu0 %v483, 111
      %v1315 = vpop.permute.xlu0 %1314
      %1316 = vrot.lane.b32.xlu0 %v953, 111
      %v1317 = vpop.permute.xlu0 %1316
      %1318 = vrot.lane.b32.xlu0 %v950, 111
      %v1319 = vpop.permute.xlu0 %1318
      %1320 = vrot.lane.b32.xlu0 0.0, 111
      %v1321 = vpop.permute.xlu0 %1320
      %1322 = vrot.lane.b32.xlu0 %v485, 111
      %v1323 = vpop.permute.xlu0 %1322
      %1324 = vrot.lane.b32.xlu0 %v954, 111
      %v1325 = vpop.permute.xlu0 %1324
      %1326 = vrot.lane.b32.xlu0 %v951, 111
      %v1327 = vpop.permute.xlu0 %1326
      %vm1328 = vcmp.lt.s32.totalorder %v970, 111
      %v1329 = vsel %vm1328, %v1315, %v1323
      %v1330 = vsel %vm1328, %v1317, %v1325
      %v1331 = vsel %vm1328, %v1319, %v1327
      %v1332 = vsel %vm1328, %v1323, %v1315
      %v1333 = vsel %vm1328, %v1325, %v1317
      %v1334 = vsel %vm1328, %v1327, %v1319
      %s1335 = scalar_lea.vmem %s10, 16
      %v1336 = vld [vmem:[%s1335] ss:$8 sm:$0x3]
      %v1338 = vlaneseq
      %v1339 = vshrl.u32 %v1338, 7
      %v1340 = vsub.s32 0, %v1339
      %v1341 = vrot.slane %v1336, %v1340
      %v1342 = vlaneseq
      %v1343 = vshrl.u32 %v1342, 7
      %v1344 = vsub.s32 1, %v1343
      %v1345 = vrot.slane %v1336, %v1344
      %v1348 = vmul.f32 %v1329, %v1341
      %v1349 = vmul.f32 %v1332, %v1345
      %v1350 = vmul.f32 %v1330, %v1341
      %v1351 = vmul.f32 %v1333, %v1345
      %v1352 = vmul.f32 %v1331, %v1341
      %v1353 = vmul.f32 %v1334, %v1345
      %v1354 = vmul.f32 %v1321, %v1341
      %v1355 = vmul.f32 %v1321, %v1345
      %v1356 = vpack.c.bf16 %v1350, %v1348
      %v1357 = vpack.c.bf16 %v1351, %v1349
      %v1358 = vpack.c.bf16 %v1354, %v1352
      %v1359 = vpack.c.bf16 %v1355, %v1353
      %1360 = vst [vmem:[#allocation2 + $0x100] sm:$0xff] %v1356
      %1361 = vst [vmem:[#allocation2 + $0x108] sm:$0xff] %v1357
      %1362 = vst [vmem:[#allocation2 + $0x110] sm:$0xff] %v1358
      %1363 = vst [vmem:[#allocation2 + $0x118] sm:$0xff] %v1359
      %v1364 = vld [vmem:[%s7] sm:$0xff]
      %v1365 = vld [vmem:[%s7 + $0x8] sm:$0xf]
      %v1366 = vld [vmem:[#allocation2] sm:$0xff]
      %v1367 = vld [vmem:[#allocation2 + $0x8] sm:$0xff]
      %v1368 = vld [vmem:[#allocation2 + $0x10] sm:$0xff]
      %v1369 = vld [vmem:[#allocation2 + $0x18] sm:$0xff]
      %v1370 = vld [vmem:[#allocation2 + $0x20] sm:$0xff]
      %v1371 = vld [vmem:[#allocation2 + $0x28] sm:$0xff]
      %v1372 = vld [vmem:[#allocation2 + $0x30] sm:$0xff]
      %v1373 = vld [vmem:[#allocation2 + $0x38] sm:$0xff]
      %v1374 = vld [vmem:[#allocation2 + $0x40] sm:$0xff]
      %v1375 = vld [vmem:[#allocation2 + $0x48] sm:$0xff]
      %v1376 = vld [vmem:[#allocation2 + $0x50] sm:$0xff]
      %v1377 = vld [vmem:[#allocation2 + $0x58] sm:$0xff]
      %v1378 = vld [vmem:[#allocation2 + $0x60] sm:$0xff]
      %v1379 = vld [vmem:[#allocation2 + $0x68] sm:$0xff]
      %v1380 = vld [vmem:[#allocation2 + $0x70] sm:$0xff]
      %v1381 = vld [vmem:[#allocation2 + $0x78] sm:$0xff]
      %v1382 = vld [vmem:[#allocation2 + $0x80] sm:$0xff]
      %v1383 = vld [vmem:[#allocation2 + $0x88] sm:$0xff]
      %v1384 = vld [vmem:[#allocation2 + $0x90] sm:$0xff]
      %v1385 = vld [vmem:[#allocation2 + $0x98] sm:$0xff]
      %v1386 = vld [vmem:[#allocation2 + $0xa0] sm:$0xff]
      %v1387 = vld [vmem:[#allocation2 + $0xa8] sm:$0xff]
      %v1388 = vld [vmem:[#allocation2 + $0xb0] sm:$0xff]
      %v1389 = vld [vmem:[#allocation2 + $0xb8] sm:$0xff]
      %v1390 = vld [vmem:[#allocation2 + $0xc0] sm:$0xff]
      %v1391 = vld [vmem:[#allocation2 + $0xc8] sm:$0xff]
      %v1392 = vld [vmem:[#allocation2 + $0xd0] sm:$0xff]
      %v1393 = vld [vmem:[#allocation2 + $0xd8] sm:$0xff]
      %v1394 = vld [vmem:[#allocation2 + $0xe0] sm:$0xff]
      %v1395 = vld [vmem:[#allocation2 + $0xe8] sm:$0xff]
      %v1396 = vld [vmem:[#allocation2 + $0xf0] sm:$0xff]
      %v1397 = vld [vmem:[#allocation2 + $0xf8] sm:$0xff]
      %v1398 = vld [vmem:[#allocation2 + $0x100] sm:$0xff]
      %v1399 = vld [vmem:[#allocation2 + $0x108] sm:$0xff]
      %v1400 = vld [vmem:[#allocation2 + $0x110] sm:$0xff]
      %v1401 = vld [vmem:[#allocation2 + $0x118] sm:$0xff]
      %v1402 = vld [vmem:[%s8] sm:$0xff]
      %1404 = vset.pattern.permute.xlu0 0
      %1405 = vperm.xlu0 %1404, %v1402
      %v1406 = vpop.permute.xlu0 %1405
      %v1410 = vunpack.c.l.b16 %v1364
      %v1411 = vunpack.c.h.b16 %v1364
      %v1412 = vunpack.c.l.b16 %v1365
      %v1413 = vpack.c.b16 %v1410, %v1410
      %v1414 = vpack.c.b16 %v1411, %v1411
      %v1415 = vpack.c.b16 %v1412, %v1412
      %vm1418 = vcmask 261120
      %v1420 = vsel %vm1418, %v1415, 0
      %1422 = vmatprep.subr.bf16.mxu0 %v1367
      %1423 = vmatpush1.bf16.msra.mxu0 %v1366
      %1424 = vmatprep.subr.bf16.mxu0 %v1369
      %1425 = vmatpush1.bf16.msra.mxu0 %v1368
      %1426 = vmatprep.subr.bf16.mxu0 %v1371
      %1427 = vmatpush1.bf16.msra.mxu0 %v1370
      %1428 = vmatprep.subr.bf16.mxu0 %v1373
      %1429 = vmatpush1.bf16.msra.mxu0 %v1372
      %1430 = vmatprep.subr.bf16.mxu0 %v1375
      %1431 = vmatpush1.bf16.msra.mxu0 %v1374
      %1432 = vmatprep.subr.bf16.mxu0 %v1377
      %1433 = vmatpush1.bf16.msra.mxu0 %v1376
      %1434 = vmatprep.subr.bf16.mxu0 %v1379
      %1435 = vmatpush1.bf16.msra.mxu0 %v1378
      %1436 = vmatprep.subr.bf16.mxu0 %v1381
      %1437 = vmatpush1.bf16.msra.mxu0 %v1380
      %1438 = vmatprep.subr.bf16.mxu0 %v1383
      %1439 = vmatpush1.bf16.msra.mxu0 %v1382
      %1440 = vmatprep.subr.bf16.mxu0 %v1385
      %1441 = vmatpush1.bf16.msra.mxu0 %v1384
      %1442 = vmatprep.subr.bf16.mxu0 %v1387
      %1443 = vmatpush1.bf16.msra.mxu0 %v1386
      %1444 = vmatprep.subr.bf16.mxu0 %v1389
      %1445 = vmatpush1.bf16.msra.mxu0 %v1388
      %1446 = vmatprep.subr.bf16.mxu0 %v1391
      %1447 = vmatpush1.bf16.msra.mxu0 %v1390
      %1448 = vmatprep.subr.bf16.mxu0 %v1393
      %1449 = vmatpush1.bf16.msra.mxu0 %v1392
      %1450 = vmatprep.subr.bf16.mxu0 %v1395
      %1451 = vmatpush1.bf16.msra.mxu0 %v1394
      %1452 = vmatprep.subr.bf16.mxu0 %v1397
      %1453 = vmatpush1.bf16.msra.mxu0 %v1396
      %1454 = vmatprep.mubr.bf16.mxu0 %v1414
      %1455 = vmatmul.mubr.bf16.gmra.mrb[0].mxu0 %v1413
      %v1456 = vpop.f32.mrb[0].mxu0
      %v1457 = vadd.f32 %v1406, %v1456
      %v1458 = vpop.f32.mrb[0].mxu0
      %v1459 = vadd.f32 %v1406, %v1458
      %v1460 = vpop.f32.mrb[0].mxu0
      %v1461 = vpop.f32.mrb[0].mxu0
      %1462 = vdwg.mxu0
      %1463 = vmatprep.subr.bf16.mxu0 %v1399
      %1464 = vmatpush1.bf16.msra.mxu0 %v1398
      %1465 = vmatprep.subr.bf16.mxu0 %v1401
      %1466 = vmatpush1.bf16.msra.mxu0 %v1400
      %1467 = vmatprep.subr.bf16.mxu0 0
      %1468 = vmatpush1.bf16.msra.mxu0 0
      %1469 = vmatprep.subr.bf16.mxu0 0
      %1470 = vmatpush1.bf16.msra.mxu0 0
      %1471 = vmatprep.subr.bf16.mxu0 0
      %1472 = vmatpush1.bf16.msra.mxu0 0
      %1473 = vmatprep.subr.bf16.mxu0 0
      %1474 = vmatpush1.bf16.msra.mxu0 0
      %1475 = vmatprep.subr.bf16.mxu0 0
      %1476 = vmatpush1.bf16.msra.mxu0 0
      %1477 = vmatprep.subr.bf16.mxu0 0
      %1478 = vmatpush1.bf16.msra.mxu0 0
      %1479 = vmatprep.subr.bf16.mxu0 0
      %1480 = vmatpush1.bf16.msra.mxu0 0
      %1481 = vmatprep.subr.bf16.mxu0 0
      %1482 = vmatpush1.bf16.msra.mxu0 0
      %1483 = vmatprep.subr.bf16.mxu0 0
      %1484 = vmatpush1.bf16.msra.mxu0 0
      %1485 = vmatprep.subr.bf16.mxu0 0
      %1486 = vmatpush1.bf16.msra.mxu0 0
      %1487 = vmatprep.subr.bf16.mxu0 0
      %1488 = vmatpush1.bf16.msra.mxu0 0
      %1489 = vmatprep.subr.bf16.mxu0 0
      %1490 = vmatpush1.bf16.msra.mxu0 0
      %1491 = vmatprep.subr.bf16.mxu0 0
      %1492 = vmatpush1.bf16.msra.mxu0 0
      %1493 = vmatprep.subr.bf16.mxu0 0
      %1494 = vmatpush1.bf16.msra.mxu0 0
      %1495 = vmatprep.mubr.bf16.mxu0 0
      %1496 = vmatmul.mubr.bf16.gmra.mrb[0].mxu0 %v1420
      %v1497 = vpop.f32.mrb[0].mxu0
      %v1498 = vadd.f32 %v1457, %v1497
      %v1499 = vpop.f32.mrb[0].mxu0
      %v1500 = vadd.f32 %v1459, %v1499
      %v1501 = vpop.f32.mrb[0].mxu0
      %v1502 = vpop.f32.mrb[0].mxu0
      %1503 = vdwg.mxu0
      %1504 = vst [vmem:[%s423] sm:$0xff] %v1498
      %1505 = vst [vmem:[%s423 + $0x8] sm:$0xff] %v1500
      %p1506 = scmp.lt.s32.totalorder %s22, 1
      %s1507 = scalar_select %p1506, %s22, 1
      %s1508 = smul.addr %s1507, 2
      %s1509 = smul.addr %s1508, 8
      %s1510 = scalar_lea.vmem %s11, %s1509
      // Predicated region
      $region65: #{merge_c2f_t_c_forward.1} parent=63 // pred_check
        %p1511 = pneg %p286
      $region66: #{merge_c2f_t_c_forward.1} parent=63 // pred_check_branch
        %1513 = sbr.rel (%p1511) target = $region68
      $region67: #{merge_c2f_t_c_forward.1} parent=63 // pred_region
        _
      $region68: #{merge_c2f_t_c_forward.1} parent=63 // pred_fallthru
        _
    $region64: #{merge_c2f_t_c_forward.1} parent=5 // pred_fallthru
      _
    %p1514 = scmp.le.s32.totalorder 2, %s17
    // Predicated region
    $region69: #{merge_c2f_t_c_forward.1} parent=5 // pred_check
      %p1515 = pneg %p1514
    $region70: #{merge_c2f_t_c_forward.1} parent=5 // pred_check_branch
      %1517 = sbr.rel (%p1515) target = $region72
    $region71: #{merge_c2f_t_c_forward.1} parent=5 // pred_region
      %s1518 = ssub.s32 %s17, 2
      // Predicated region
      $region73: #{merge_c2f_t_c_forward.1} parent=71 // pred_check
        %p1519 = pneg %p292
      $region74: #{merge_c2f_t_c_forward.1} parent=71 // pred_check_branch
        %1521 = sbr.rel (%p1519) target = $region76
      $region75: #{merge_c2f_t_c_forward.1} parent=71 // pred_region
        %p1522 = scmp.lt.s32.totalorder %s23, 1
        %s1523 = scalar_select %p1522, %s23, 1
        %s1524 = smul.addr %s1523, 2
        %s1525 = smul.addr %s1524, 8
        %s1526 = scalar_lea.vmem %s11, %s1525
      $region76: #{merge_c2f_t_c_forward.1} parent=71 // pred_fallthru
        _
    $region72: #{merge_c2f_t_c_forward.1} parent=5 // pred_fallthru
      _
  $region6: #{merge_c2f_t_c_forward.1} parent=0 // loop_footer
    %s21 = sadd.s32 1, %s17
  $region7: #{merge_c2f_t_c_forward.1} parent=0 // loop_footer_branch
    %16 = sbr.rel target = $region3
  $region8: #{merge_c2f_t_c_forward.1} parent=0 // loop_exit
    _

</llo_original>
